<compile_context>
chip_gen: v5e
topology: v5e:2x2
jax: 0.10.0
libtpu: 0.0.40
codegen_flags: <defaults>
</compile_context>

<pallas_src>
import functools

import jax
import jax.numpy as jnp
from jax import lax
from jax.experimental import pallas as pl
from jax.experimental.pallas import tpu as pltpu

LANE = 128      # lane width of a vreg / MXU tile alignment
SUBLANE = 8     # sublane count of a vreg


def _round_up(n, m):
    return ((n + m - 1) // m) * m


def _critic_kernel(n_hidden, *refs):
    """refs = (x_ref, w0, b0, ..., w_{H-1}, b_{H-1}, w_last_row, b_last, out_ref).

    Hidden layers are Linear + ReLU (batch on sublanes, features on lanes).
    The final Linear(h_last -> 1) is computed as w_last^T @ h^T so the result
    lands with batch on the lane axis: out block is (1, 1, TILE_B).
    """
    x_ref = refs[0]
    out_ref = refs[-1]
    param_refs = refs[1:-1]

    h = x_ref[...]                                        # (TILE_B, input_size) f32
    for li in range(n_hidden):
        w = param_refs[2 * li][...]                       # (fan_in_pad, fan_out_pad)
        b = param_refs[2 * li + 1][...]                   # (1, fan_out_pad) f32
        # MXU matmul (bf16 or f32 operands) with f32 accumulation; VPU bias+ReLU in f32.
        h = jnp.dot(h.astype(w.dtype), w, preferred_element_type=jnp.float32) + b
        h = jnp.maximum(h, 0.0)

    w_row = param_refs[2 * n_hidden][...]                 # (1, h_last_pad)
    b_last = param_refs[2 * n_hidden + 1][...]            # (1, 1) f32
    # Transposed final matmul: contract the last dims of both operands
    # (w_last^T @ h^T) -> (1, TILE_B), i.e. batch on lanes.
    vals = lax.dot_general(
        w_row, h.astype(w_row.dtype),
        dimension_numbers=(((1,), (1,)), ((), ())),
        preferred_element_type=jnp.float32)               # (1, TILE_B)
    out_ref[...] = (vals + b_last).reshape(out_ref.shape).astype(out_ref.dtype)


def init_critic_params(key, input_size, hidden_layers):
    """Deterministic init mimicking nn.Linear's U(-1/sqrt(fan_in), 1/sqrt(fan_in))."""
    dims = [input_size] + list(hidden_layers) + [1]
    params = []
    for i in range(len(dims) - 1):
        fan_in, fan_out = dims[i], dims[i + 1]
        key, kw, kb = jax.random.split(key, 3)
        bound = 1.0 / jnp.sqrt(jnp.float32(fan_in))
        w = jax.random.uniform(kw, (fan_in, fan_out), jnp.float32, -bound, bound)
        b = jax.random.uniform(kb, (1, fan_out), jnp.float32, -bound, bound)
        params.append((w, b))
    return params


def _pad_params(params, input_size, weight_dtype):
    """Pad hidden fan_outs to multiples of 128 lanes (and the next fan_in to
    match).  The last layer is stored transposed as a (1, h_last_pad) row plus
    a (1, 1) bias.  Returns a flat [w0, b0, ..., w_row, b_last] list."""
    hidden, (w_last, b_last) = params[:-1], params[-1]
    flat = []
    prev = input_size
    for (w, b) in hidden:
        fan_in, fan_out = w.shape
        out_pad = _round_up(fan_out, LANE)
        wp = jnp.zeros((prev, out_pad), weight_dtype)
        wp = wp.at[:fan_in, :fan_out].set(w.astype(weight_dtype))
        bp = jnp.zeros((1, out_pad), jnp.float32)
        bp = bp.at[:, :fan_out].set(b.astype(jnp.float32))
        flat.extend([wp, bp])
        prev = out_pad
    fan_in, _ = w_last.shape
    w_row = jnp.zeros((1, prev), weight_dtype)
    w_row = w_row.at[0, :fan_in].set(w_last[:, 0].astype(weight_dtype))
    flat.extend([w_row, b_last.reshape(1, 1).astype(jnp.float32)])
    return flat


def critic_forward(x, params, *, tile_b=None, weight_dtype=jnp.bfloat16):
    """Critic MLP forward pass as one batch-gridded Pallas kernel.

    x: (B, input_size) float32 states.  Returns (B, 1) float32 values.
    """
    batch, input_size = x.shape
    n_hidden = len(params) - 1
    assert n_hidden >= 1, "Critic needs at least one hidden layer"

    flat_params = _pad_params(params, input_size, weight_dtype)

    # Batch tile: large (overhead-amortizing, ~MXU-row aligned) but split into
    # >= 2 grid steps when the batch allows so both v7x TensorCores get work.
    if tile_b is None:
        if batch <= 256:
            tile_b = 256
        else:
            tile_b = min(1024, _round_up(pl.cdiv(batch, 2), 256))
    else:
        tile_b = max(LANE, _round_up(tile_b, LANE))
    b_pad = _round_up(batch, tile_b)
    num_tiles = b_pad // tile_b

    x_p = x.astype(jnp.float32)
    if b_pad != batch:
        x_p = jnp.pad(x_p, ((0, b_pad - batch), (0, 0)))

    # Output: (num_tiles, 1, tile_b), batch packed on the lane axis.
    out_shape = jax.ShapeDtypeStruct((num_tiles, 1, tile_b), jnp.float32)
    out_spec = pl.BlockSpec((1, 1, tile_b), lambda i: (i, 0, 0))

    # VMEM budget: resident weights (x2 headroom in case they end up
    # double-buffered) + double-buffered x/out tiles + live activations.
    nbytes = lambda a: int(a.size) * a.dtype.itemsize
    weight_bytes = sum(nbytes(p) for p in flat_params)
    widest = max(p.shape[-1] for p in flat_params)
    est = (2 * weight_bytes
           + 2 * tile_b * input_size * 4     # x tile, double-buffered
           + 2 * tile_b * 4                  # out tile, double-buffered
           + 2 * tile_b * widest * 4)        # live f32 activations
    vmem_limit = int(min(64 * 1024 * 1024, max(2 * est + (4 << 20), 16 << 20)))
    # TODO(synk): if the padded weights alone approach ~3/4 of VMEM (very wide
    # hidden layers), tile fan_in/fan_out over an extra grid axis instead of
    # keeping every weight fully resident.

    flops = 2 * b_pad * sum(int(p.size) for p in flat_params[0::2])
    bytes_accessed = nbytes(x_p) + weight_bytes + b_pad * 4
    cost = pl.CostEstimate(flops=flops, transcendentals=0,
                           bytes_accessed=bytes_accessed)

    kernel = functools.partial(_critic_kernel, n_hidden)

    def run(buffered_weights):
        in_specs = [pl.BlockSpec((tile_b, input_size), lambda i: (i, 0))]
        for p in flat_params:
            if buffered_weights:
                # Constant index_map -> weights never change across grid steps;
                # a single buffer halves their VMEM footprint.
                spec = pl.BlockSpec(p.shape, lambda i: (0, 0),
                                    pipeline_mode=pl.Buffered(1))
            else:
                spec = pl.BlockSpec(p.shape, lambda i: (0, 0))
            in_specs.append(spec)
        return pl.pallas_call(
            kernel,
            out_shape=out_shape,
            grid=(num_tiles,),
            in_specs=in_specs,
            out_specs=out_spec,
            compiler_params=pltpu.CompilerParams(
                dimension_semantics=("parallel",),
                vmem_limit_bytes=vmem_limit,
            ),
            cost_estimate=cost,
        )(x_p, *flat_params)

    try:
        out_padded = run(buffered_weights=True)
    except Exception:
        # Fallback for JAX versions without BlockSpec(pipeline_mode=...);
        # weights are then default double-buffered but still VMEM-resident.
        out_padded = run(buffered_weights=False)

    # Unpack batch-on-lanes output and drop padded batch rows.
    return out_padded.reshape(b_pad)[:batch].reshape(batch, 1)


def critic_forward_ref(x, params):
    """Pure-JAX reference for correctness checking."""
    h = x
    for i, (w, b) in enumerate(params):
        h = h @ w + b
        if i < len(params) - 1:
            h = jnp.maximum(h, 0.0)
    return h


if __name__ == "__main__":
    key = jax.random.PRNGKey(0)
    key, kx, kp = jax.random.split(key, 3)

    # Small shapes consistent with the module: a batch of low-dim state vectors.
    batch = 500           # non-multiple of the tile -> exercises batch padding
    input_size = 16
    hidden_layers = [32, 32]

    x = jax.random.normal(kx, (batch, input_size), dtype=jnp.float32)
    params = init_critic_params(kp, input_size, hidden_layers)
    ref = critic_forward_ref(x, params)

    # f32 weights: near-exact vs the pure-JAX reference (2 grid steps, tile_b=256).
    out_f32 = jax.block_until_ready(
        critic_forward(x, params, weight_dtype=jnp.float32))
    assert out_f32.shape == (batch, 1)
    assert jnp.allclose(out_f32, ref, atol=1e-4, rtol=1e-4)

    # Default bf16 weights (MXU-native on v6e/v7x): small quantization delta only.
    out_bf16 = jax.block_until_ready(critic_forward(x, params))
    assert out_bf16.shape == (batch, 1)
    assert jnp.allclose(out_bf16, ref, atol=5e-2, rtol=5e-2)

    print("KERNEL_OK")
</pallas_src>

<mosaic_0001>
module attributes {stable_mosaic.version = 11 : i64} {
  func.func @_critic_kernel(%arg0: i32, %arg1: memref<256x16xf32, #tpu.memory_space<vmem>>, %arg2: memref<16x128xf32, #tpu.memory_space<vmem>>, %arg3: memref<1x128xf32, #tpu.memory_space<vmem>>, %arg4: memref<128x128xf32, #tpu.memory_space<vmem>>, %arg5: memref<1x128xf32, #tpu.memory_space<vmem>>, %arg6: memref<1x128xf32, #tpu.memory_space<vmem>>, %arg7: memref<1x1xf32, #tpu.memory_space<vmem>>, %arg8: memref<1x1x256xf32, #tpu.memory_space<vmem>>) attributes {dimension_semantics = [#tpu.dimension_semantics<parallel>], iteration_bounds = array<i64: 2>, scalar_prefetch = 0 : i64, scratch_operands = 0 : i64, tpu.core_type = #tpu.core_type<tc>, window_params = [{transform_indices = @transform_0, window_bounds = array<i64: 256, 16>}, {pipeline_mode = #tpu.pipeline_mode<synchronous>, transform_indices = @transform_1, window_bounds = array<i64: 16, 128>}, {pipeline_mode = #tpu.pipeline_mode<synchronous>, transform_indices = @transform_2, window_bounds = array<i64: 1, 128>}, {pipeline_mode = #tpu.pipeline_mode<synchronous>, transform_indices = @transform_3, window_bounds = array<i64: 128, 128>}, {pipeline_mode = #tpu.pipeline_mode<synchronous>, transform_indices = @transform_4, window_bounds = array<i64: 1, 128>}, {pipeline_mode = #tpu.pipeline_mode<synchronous>, transform_indices = @transform_5, window_bounds = array<i64: 1, 128>}, {pipeline_mode = #tpu.pipeline_mode<synchronous>, transform_indices = @transform_6, window_bounds = array<i64: 1, 1>}, {transform_indices = @transform_7, window_bounds = array<i64: 1, 1, 256>}]} {
    %c0 = arith.constant 0 : index
    %c0_0 = arith.constant 0 : index
    %0 = vector.load %arg1[%c0, %c0_0] : memref<256x16xf32, #tpu.memory_space<vmem>>, vector<256x16xf32>
    %c0_1 = arith.constant 0 : index
    %c0_2 = arith.constant 0 : index
    %1 = vector.load %arg2[%c0_1, %c0_2] : memref<16x128xf32, #tpu.memory_space<vmem>>, vector<16x128xf32>
    %c0_3 = arith.constant 0 : index
    %c0_4 = arith.constant 0 : index
    %2 = vector.load %arg3[%c0_3, %c0_4] : memref<1x128xf32, #tpu.memory_space<vmem>>, vector<1x128xf32>
    %cst = arith.constant dense<0.000000e+00> : vector<256x128xf32>
    %3 = tpu.matmul %0, %1, %cst {dimension_numbers = #tpu.dot_dimension_numbers<[1], [0], [0], [1], [0, 0, 1, 1], [], []>} : vector<256x16xf32>, vector<16x128xf32>, vector<256x128xf32> -> vector<256x128xf32>
    %4 = vector.broadcast %2 : vector<1x128xf32> to vector<256x128xf32>
    %5 = arith.addf %3, %4 : vector<256x128xf32>
    %cst_5 = arith.constant 0.000000e+00 : f32
    %6 = vector.broadcast %cst_5 : f32 to vector<256x128xf32>
    %7 = arith.maximumf %5, %6 : vector<256x128xf32>
    %c0_6 = arith.constant 0 : index
    %c0_7 = arith.constant 0 : index
    %8 = vector.load %arg4[%c0_6, %c0_7] : memref<128x128xf32, #tpu.memory_space<vmem>>, vector<128x128xf32>
    %c0_8 = arith.constant 0 : index
    %c0_9 = arith.constant 0 : index
    %9 = vector.load %arg5[%c0_8, %c0_9] : memref<1x128xf32, #tpu.memory_space<vmem>>, vector<1x128xf32>
    %cst_10 = arith.constant dense<0.000000e+00> : vector<256x128xf32>
    %10 = tpu.matmul %7, %8, %cst_10 {dimension_numbers = #tpu.dot_dimension_numbers<[1], [0], [0], [1], [0, 0, 1, 1], [], []>} : vector<256x128xf32>, vector<128x128xf32>, vector<256x128xf32> -> vector<256x128xf32>
    %11 = vector.broadcast %9 : vector<1x128xf32> to vector<256x128xf32>
    %12 = arith.addf %10, %11 : vector<256x128xf32>
    %cst_11 = arith.constant 0.000000e+00 : f32
    %13 = vector.broadcast %cst_11 : f32 to vector<256x128xf32>
    %14 = arith.maximumf %12, %13 : vector<256x128xf32>
    %c0_12 = arith.constant 0 : index
    %c0_13 = arith.constant 0 : index
    %15 = vector.load %arg6[%c0_12, %c0_13] : memref<1x128xf32, #tpu.memory_space<vmem>>, vector<1x128xf32>
    %c0_14 = arith.constant 0 : index
    %c0_15 = arith.constant 0 : index
    %16 = vector.load %arg7[%c0_14, %c0_15] : memref<1x1xf32, #tpu.memory_space<vmem>>, vector<1x1xf32>
    %cst_16 = arith.constant dense<0.000000e+00> : vector<1x256xf32>
    %17 = tpu.matmul %15, %14, %cst_16 {dimension_numbers = #tpu.dot_dimension_numbers<[1], [1], [0], [0], [0, 0, 1, 0], [], []>} : vector<1x128xf32>, vector<256x128xf32>, vector<1x256xf32> -> vector<1x256xf32>
    %18 = vector.broadcast %16 : vector<1x1xf32> to vector<1x256xf32>
    %19 = arith.addf %17, %18 : vector<1x256xf32>
    %20 = vector.shape_cast %19 : vector<1x256xf32> to vector<1x1x256xf32>
    %c0_17 = arith.constant 0 : index
    %c0_18 = arith.constant 0 : index
    %c0_19 = arith.constant 0 : index
    %21 = vector.load %arg8[%c0_17, %c0_18, %c0_19] : memref<1x1x256xf32, #tpu.memory_space<vmem>>, vector<1x1x256xf32>
    tpu.vector_store %arg8[%c0_17, %c0_18, %c0_19], %20 {strides = array<i32>} : memref<1x1x256xf32, #tpu.memory_space<vmem>>, vector<1x1x256xf32>,
    return
  }
  func.func @transform_0(%arg0: i32) -> (i32, i32) {
    %c0_i32 = arith.constant 0 : i32
    %c0_i32_0 = arith.constant 0 : i32
    return %arg0, %c0_i32 : i32, i32
  }
  func.func @transform_1(%arg0: i32) -> (i32, i32) {
    %c0_i32 = arith.constant 0 : i32
    %c0_i32_0 = arith.constant 0 : i32
    %c0_i32_1 = arith.constant 0 : i32
    return %c0_i32, %c0_i32_0 : i32, i32
  }
  func.func @transform_2(%arg0: i32) -> (i32, i32) {
    %c0_i32 = arith.constant 0 : i32
    %c0_i32_0 = arith.constant 0 : i32
    %c0_i32_1 = arith.constant 0 : i32
    return %c0_i32, %c0_i32_0 : i32, i32
  }
  func.func @transform_3(%arg0: i32) -> (i32, i32) {
    %c0_i32 = arith.constant 0 : i32
    %c0_i32_0 = arith.constant 0 : i32
    %c0_i32_1 = arith.constant 0 : i32
    return %c0_i32, %c0_i32_0 : i32, i32
  }
  func.func @transform_4(%arg0: i32) -> (i32, i32) {
    %c0_i32 = arith.constant 0 : i32
    %c0_i32_0 = arith.constant 0 : i32
    %c0_i32_1 = arith.constant 0 : i32
    return %c0_i32, %c0_i32_0 : i32, i32
  }
  func.func @transform_5(%arg0: i32) -> (i32, i32) {
    %c0_i32 = arith.constant 0 : i32
    %c0_i32_0 = arith.constant 0 : i32
    %c0_i32_1 = arith.constant 0 : i32
    return %c0_i32, %c0_i32_0 : i32, i32
  }
  func.func @transform_6(%arg0: i32) -> (i32, i32) {
    %c0_i32 = arith.constant 0 : i32
    %c0_i32_0 = arith.constant 0 : i32
    %c0_i32_1 = arith.constant 0 : i32
    return %c0_i32, %c0_i32_0 : i32, i32
  }
  func.func @transform_7(%arg0: i32) -> (i32, i32, i32) {
    %c0_i32 = arith.constant 0 : i32
    %c0_i32_0 = arith.constant 0 : i32
    %c0_i32_1 = arith.constant 0 : i32
    return %arg0, %c0_i32, %c0_i32_0 : i32, i32, i32
  }
}

module attributes {stable_mosaic.version = 11 : i64} {
  func.func @_critic_kernel(%arg0: i32, %arg1: memref<256x16xf32, #tpu.memory_space<vmem>>, %arg2: memref<16x128xf32, #tpu.memory_space<vmem>>, %arg3: memref<1x128xf32, #tpu.memory_space<vmem>>, %arg4: memref<128x128xf32, #tpu.memory_space<vmem>>, %arg5: memref<1x128xf32, #tpu.memory_space<vmem>>, %arg6: memref<1x128xf32, #tpu.memory_space<vmem>>, %arg7: memref<1x1xf32, #tpu.memory_space<vmem>>, %arg8: memref<1x1x256xf32, #tpu.memory_space<vmem>>) attributes {dimension_semantics = [#tpu.dimension_semantics<parallel>], iteration_bounds = array<i64: 2>, scalar_prefetch = 0 : i64, scratch_operands = 0 : i64, tpu.core_type = #tpu.core_type<tc>, window_params = [{transform_indices = @transform_0, window_bounds = array<i64: 256, 16>}, {pipeline_mode = #tpu.pipeline_mode<synchronous>, transform_indices = @transform_1, window_bounds = array<i64: 16, 128>}, {pipeline_mode = #tpu.pipeline_mode<synchronous>, transform_indices = @transform_2, window_bounds = array<i64: 1, 128>}, {pipeline_mode = #tpu.pipeline_mode<synchronous>, transform_indices = @transform_3, window_bounds = array<i64: 128, 128>}, {pipeline_mode = #tpu.pipeline_mode<synchronous>, transform_indices = @transform_4, window_bounds = array<i64: 1, 128>}, {pipeline_mode = #tpu.pipeline_mode<synchronous>, transform_indices = @transform_5, window_bounds = array<i64: 1, 128>}, {pipeline_mode = #tpu.pipeline_mode<synchronous>, transform_indices = @transform_6, window_bounds = array<i64: 1, 1>}, {transform_indices = @transform_7, window_bounds = array<i64: 1, 1, 256>}]} {
    %c0 = arith.constant 0 : index
    %c0_0 = arith.constant 0 : index
    %0 = vector.load %arg1[%c0, %c0_0] : memref<256x16xf32, #tpu.memory_space<vmem>>, vector<256x16xf32>
    %c0_1 = arith.constant 0 : index
    %c0_2 = arith.constant 0 : index
    %1 = vector.load %arg2[%c0_1, %c0_2] : memref<16x128xf32, #tpu.memory_space<vmem>>, vector<16x128xf32>
    %c0_3 = arith.constant 0 : index
    %c0_4 = arith.constant 0 : index
    %2 = vector.load %arg3[%c0_3, %c0_4] : memref<1x128xf32, #tpu.memory_space<vmem>>, vector<1x128xf32>
    %cst = arith.constant dense<0.000000e+00> : vector<256x128xf32>
    %3 = tpu.matmul %0, %1, %cst {dimension_numbers = #tpu.dot_dimension_numbers<[1], [0], [0], [1], [0, 0, 1, 1], [], []>} : vector<256x16xf32>, vector<16x128xf32>, vector<256x128xf32> -> vector<256x128xf32>
    %4 = vector.broadcast %2 : vector<1x128xf32> to vector<256x128xf32>
    %5 = arith.addf %3, %4 : vector<256x128xf32>
    %cst_5 = arith.constant 0.000000e+00 : f32
    %6 = vector.broadcast %cst_5 : f32 to vector<256x128xf32>
    %7 = arith.maximumf %5, %6 : vector<256x128xf32>
    %c0_6 = arith.constant 0 : index
    %c0_7 = arith.constant 0 : index
    %8 = vector.load %arg4[%c0_6, %c0_7] : memref<128x128xf32, #tpu.memory_space<vmem>>, vector<128x128xf32>
    %c0_8 = arith.constant 0 : index
    %c0_9 = arith.constant 0 : index
    %9 = vector.load %arg5[%c0_8, %c0_9] : memref<1x128xf32, #tpu.memory_space<vmem>>, vector<1x128xf32>
    %cst_10 = arith.constant dense<0.000000e+00> : vector<256x128xf32>
    %10 = tpu.matmul %7, %8, %cst_10 {dimension_numbers = #tpu.dot_dimension_numbers<[1], [0], [0], [1], [0, 0, 1, 1], [], []>} : vector<256x128xf32>, vector<128x128xf32>, vector<256x128xf32> -> vector<256x128xf32>
    %11 = vector.broadcast %9 : vector<1x128xf32> to vector<256x128xf32>
    %12 = arith.addf %10, %11 : vector<256x128xf32>
    %cst_11 = arith.constant 0.000000e+00 : f32
    %13 = vector.broadcast %cst_11 : f32 to vector<256x128xf32>
    %14 = arith.maximumf %12, %13 : vector<256x128xf32>
    %c0_12 = arith.constant 0 : index
    %c0_13 = arith.constant 0 : index
    %15 = vector.load %arg6[%c0_12, %c0_13] : memref<1x128xf32, #tpu.memory_space<vmem>>, vector<1x128xf32>
    %c0_14 = arith.constant 0 : index
    %c0_15 = arith.constant 0 : index
    %16 = vector.load %arg7[%c0_14, %c0_15] : memref<1x1xf32, #tpu.memory_space<vmem>>, vector<1x1xf32>
    %cst_16 = arith.constant dense<0.000000e+00> : vector<1x256xf32>
    %17 = tpu.matmul %15, %14, %cst_16 {dimension_numbers = #tpu.dot_dimension_numbers<[1], [1], [0], [0], [0, 0, 1, 0], [], []>} : vector<1x128xf32>, vector<256x128xf32>, vector<1x256xf32> -> vector<1x256xf32>
    %18 = vector.broadcast %16 : vector<1x1xf32> to vector<1x256xf32>
    %19 = arith.addf %17, %18 : vector<1x256xf32>
    %20 = vector.shape_cast %19 : vector<1x256xf32> to vector<1x1x256xf32>
    %c0_17 = arith.constant 0 : index
    %c0_18 = arith.constant 0 : index
    %c0_19 = arith.constant 0 : index
    %21 = vector.load %arg8[%c0_17, %c0_18, %c0_19] : memref<1x1x256xf32, #tpu.memory_space<vmem>>, vector<1x1x256xf32>
    tpu.vector_store %arg8[%c0_17, %c0_18, %c0_19], %20 {strides = array<i32>} : memref<1x1x256xf32, #tpu.memory_space<vmem>>, vector<1x1x256xf32>,
    return
  }
  func.func @transform_0(%arg0: i32) -> (i32, i32) {
    %c0_i32 = arith.constant 0 : i32
    %c0_i32_0 = arith.constant 0 : i32
    return %arg0, %c0_i32 : i32, i32
  }
  func.func @transform_1(%arg0: i32) -> (i32, i32) {
    %c0_i32 = arith.constant 0 : i32
    %c0_i32_0 = arith.constant 0 : i32
    %c0_i32_1 = arith.constant 0 : i32
    return %c0_i32, %c0_i32_0 : i32, i32
  }
  func.func @transform_2(%arg0: i32) -> (i32, i32) {
    %c0_i32 = arith.constant 0 : i32
    %c0_i32_0 = arith.constant 0 : i32
    %c0_i32_1 = arith.constant 0 : i32
    return %c0_i32, %c0_i32_0 : i32, i32
  }
  func.func @transform_3(%arg0: i32) -> (i32, i32) {
    %c0_i32 = arith.constant 0 : i32
    %c0_i32_0 = arith.constant 0 : i32
    %c0_i32_1 = arith.constant 0 : i32
    return %c0_i32, %c0_i32_0 : i32, i32
  }
  func.func @transform_4(%arg0: i32) -> (i32, i32) {
    %c0_i32 = arith.constant 0 : i32
    %c0_i32_0 = arith.constant 0 : i32
    %c0_i32_1 = arith.constant 0 : i32
    return %c0_i32, %c0_i32_0 : i32, i32
  }
  func.func @transform_5(%arg0: i32) -> (i32, i32) {
    %c0_i32 = arith.constant 0 : i32
    %c0_i32_0 = arith.constant 0 : i32
    %c0_i32_1 = arith.constant 0 : i32
    return %c0_i32, %c0_i32_0 : i32, i32
  }
  func.func @transform_6(%arg0: i32) -> (i32, i32) {
    %c0_i32 = arith.constant 0 : i32
    %c0_i32_0 = arith.constant 0 : i32
    %c0_i32_1 = arith.constant 0 : i32
    return %c0_i32, %c0_i32_0 : i32, i32
  }
  func.func @transform_7(%arg0: i32) -> (i32, i32, i32) {
    %c0_i32 = arith.constant 0 : i32
    %c0_i32_0 = arith.constant 0 : i32
    %c0_i32_1 = arith.constant 0 : i32
    return %arg0, %c0_i32, %c0_i32_0 : i32, i32, i32
  }
}

</mosaic_0001>

<llo_original>
// kernel: tpu_custom_call.1
$region0: #{tpu_custom_call.1}
  #allocation0 [shape = 'u32[]', space=smem, size = 0x4, offset = 0x4, fixed_abs, tag = 'smem constant byte address 0x4 - core index']
  #allocation1 [shape = 'u32[72,128]{1,0:T(1,128)}', space=vmem, size = 0x9000, scoped, tag = 'internal scratch']
  #allocation2 [shape = 'f32[1,1]{1,0:T(1,128)S(1)}', space=vmem, size = 0x200, scoped, tag = 'scoped memory for tpu_custom_call.1']
  %s0 = inlined_call_operand.vmem [shape: f32[512,16], index: 0, kind: input, shape index: {}]
  %s1 = inlined_call_operand.vmem [shape: f32[16,128], index: 1, kind: input, shape index: {}]
  %s2 = inlined_call_operand.vmem [shape: f32[1,128], index: 2, kind: input, shape index: {}]
  %s3 = inlined_call_operand.vmem [shape: f32[128,128], index: 3, kind: input, shape index: {}]
  %s4 = inlined_call_operand.vmem [shape: f32[1,128], index: 4, kind: input, shape index: {}]
  %s5 = inlined_call_operand.vmem [shape: f32[1,128], index: 5, kind: input, shape index: {}]
  %s6 = inlined_call_operand.<no memory space> [shape: f32[1,1], index: 6, kind: input, shape index: {}]
  %s7 = inlined_call_operand.hbm [shape: f32[2,1,256], index: 7, kind: output, shape index: {}]
  %s8 = sld [smem:[#allocation0]]
  $region61: #{tpu_custom_call.1} parent=0
    _
  %s10 = ssub.s32 1, %s8
  %s11 = scalar_select 0, %s10, %s8
  %v12 = vstv %s6
  %13 = vst [vmem:[#allocation2] sm:$0x1] %v12
  $region1: #{tpu_custom_call.1} parent=0
    #allocation3 [shape = 'u8[2048]{0}', space=vmem, size = 0x800, scoped, tag = 'output window, operand 0']
    #allocation4 [shape = 's32[2]{0}', space=sflag, size = 0x8, scoped, tag = 'scoped memory for tpu_custom_call.1']
    %14 = vsyncpa [#allocation4], 0
    %s15 = scalar_lea.sflag [#allocation4], 1
    %16 = vsyncpa %s15, 0
    loop: start=0, step=1, limit=4
    $region2: #{tpu_custom_call.1} parent=1 // loop_pre_header
      _
    $region3: #{tpu_custom_call.1} parent=1 // loop_header
      %s18 = sphi 0, %s22
      %p19 = scmp.ge.s32.totalorder %s18, 4
      %s28 = sphi 0, %s30
      %s31 = sphi 0, %s28
      %s32 = sphi 0, %s31
      %s48 = sphi 0, %s32
      %s52 = sphi 0, %s52
      %s54 = sphi 0, %s52
      %s55 = sphi 0, %s54
      %s69 = sphi 0, %s55
      %s73 = sphi 0, %s73
      %s75 = sphi 0, %s73
      %s76 = sphi 0, %s75
      %s90 = sphi 0, %s76
      %s94 = sphi 0, %s94
      %s96 = sphi 0, %s94
      %s97 = sphi 0, %s96
      %s111 = sphi 0, %s97
      %s115 = sphi 0, %s115
      %s117 = sphi 0, %s115
      %s118 = sphi 0, %s117
      %s132 = sphi 0, %s118
      %s136 = sphi 0, %s136
      %s138 = sphi 0, %s136
      %s139 = sphi 0, %s138
      %s153 = sphi 0, %s139
      %s157 = sphi 0, %s157
      %s159 = sphi 0, %s157
      %s160 = sphi 0, %s159
      %s174 = sphi 0, %s160
      %s180 = sphi 0, %s182
      %s183 = sphi 0, %s180
      %s184 = sphi 0, %s183
      %s200 = sphi 0, %s184
    $region4: #{tpu_custom_call.1} parent=1 // loop_header_branch
      %21 = sbr.rel (%p19) target = $region8
    $region5: #{tpu_custom_call.1} parent=1 // loop_body
      %s23 = ssub.s32 %s18, 1
      %s24 = ssub.s32 %s18, 2
      %s25 = sadd.s32 %s18, 1
      %s26 = ssub.s32 %s18, %s25
      %p27 = scmp.eq.s32.totalorder %s26, 0
      %s29 = sadd.s32 %s28, 1
      %s30 = scalar_select %p27, %s28, %s29
      %p33 = pneg %p27
      %p34 = scmp.eq.s32.totalorder %s18, 1
      %p35 = por %p33, %p34
      %p36 = scmp.ne.s32.totalorder %s28, %s31
      %p37 = scmp.eq.s32.totalorder %s18, 0
      %p38 = por %p36, %p37
      %p39 = scmp.ne.s32.totalorder %s28, %s31
      %p40 = scmp.eq.s32.totalorder %s23, 1
      %p41 = por %p39, %p40
      %p42 = scmp.ne.s32.totalorder %s31, %s32
      %p43 = scmp.eq.s32.totalorder %s23, 0
      %p44 = por %p42, %p43
      %p45 = scmp.ne.s32.totalorder %s31, %s32
      %p46 = scmp.eq.s32.totalorder %s24, 1
      %p47 = por %p45, %p46
      %p49 = scmp.ne.s32.totalorder %s32, %s48
      %p50 = scmp.eq.s32.totalorder %s24, 0
      %p51 = por %p49, %p50
      %s53 = sadd.s32 %s52, 1
      %p56 = scmp.eq.s32.totalorder %s18, 1
      %p57 = scmp.ne.s32.totalorder %s52, %s54
      %p58 = scmp.eq.s32.totalorder %s18, 0
      %p59 = por %p57, %p58
      %p60 = scmp.ne.s32.totalorder %s52, %s54
      %p61 = scmp.eq.s32.totalorder %s23, 1
      %p62 = por %p60, %p61
      %p63 = scmp.ne.s32.totalorder %s54, %s55
      %p64 = scmp.eq.s32.totalorder %s23, 0
      %p65 = por %p63, %p64
      %p66 = scmp.ne.s32.totalorder %s54, %s55
      %p67 = scmp.eq.s32.totalorder %s24, 1
      %p68 = por %p66, %p67
      %p70 = scmp.ne.s32.totalorder %s55, %s69
      %p71 = scmp.eq.s32.totalorder %s24, 0
      %p72 = por %p70, %p71
      %s74 = sadd.s32 %s73, 1
      %p77 = scmp.eq.s32.totalorder %s18, 1
      %p78 = scmp.ne.s32.totalorder %s73, %s75
      %p79 = scmp.eq.s32.totalorder %s18, 0
      %p80 = por %p78, %p79
      %p81 = scmp.ne.s32.totalorder %s73, %s75
      %p82 = scmp.eq.s32.totalorder %s23, 1
      %p83 = por %p81, %p82
      %p84 = scmp.ne.s32.totalorder %s75, %s76
      %p85 = scmp.eq.s32.totalorder %s23, 0
      %p86 = por %p84, %p85
      %p87 = scmp.ne.s32.totalorder %s75, %s76
      %p88 = scmp.eq.s32.totalorder %s24, 1
      %p89 = por %p87, %p88
      %p91 = scmp.ne.s32.totalorder %s76, %s90
      %p92 = scmp.eq.s32.totalorder %s24, 0
      %p93 = por %p91, %p92
      %s95 = sadd.s32 %s94, 1
      %p98 = scmp.eq.s32.totalorder %s18, 1
      %p99 = scmp.ne.s32.totalorder %s94, %s96
      %p100 = scmp.eq.s32.totalorder %s18, 0
      %p101 = por %p99, %p100
      %p102 = scmp.ne.s32.totalorder %s94, %s96
      %p103 = scmp.eq.s32.totalorder %s23, 1
      %p104 = por %p102, %p103
      %p105 = scmp.ne.s32.totalorder %s96, %s97
      %p106 = scmp.eq.s32.totalorder %s23, 0
      %p107 = por %p105, %p106
      %p108 = scmp.ne.s32.totalorder %s96, %s97
      %p109 = scmp.eq.s32.totalorder %s24, 1
      %p110 = por %p108, %p109
      %p112 = scmp.ne.s32.totalorder %s97, %s111
      %p113 = scmp.eq.s32.totalorder %s24, 0
      %p114 = por %p112, %p113
      %s116 = sadd.s32 %s115, 1
      %p119 = scmp.eq.s32.totalorder %s18, 1
      %p120 = scmp.ne.s32.totalorder %s115, %s117
      %p121 = scmp.eq.s32.totalorder %s18, 0
      %p122 = por %p120, %p121
      %p123 = scmp.ne.s32.totalorder %s115, %s117
      %p124 = scmp.eq.s32.totalorder %s23, 1
      %p125 = por %p123, %p124
      %p126 = scmp.ne.s32.totalorder %s117, %s118
      %p127 = scmp.eq.s32.totalorder %s23, 0
      %p128 = por %p126, %p127
      %p129 = scmp.ne.s32.totalorder %s117, %s118
      %p130 = scmp.eq.s32.totalorder %s24, 1
      %p131 = por %p129, %p130
      %p133 = scmp.ne.s32.totalorder %s118, %s132
      %p134 = scmp.eq.s32.totalorder %s24, 0
      %p135 = por %p133, %p134
      %s137 = sadd.s32 %s136, 1
      %p140 = scmp.eq.s32.totalorder %s18, 1
      %p141 = scmp.ne.s32.totalorder %s136, %s138
      %p142 = scmp.eq.s32.totalorder %s18, 0
      %p143 = por %p141, %p142
      %p144 = scmp.ne.s32.totalorder %s136, %s138
      %p145 = scmp.eq.s32.totalorder %s23, 1
      %p146 = por %p144, %p145
      %p147 = scmp.ne.s32.totalorder %s138, %s139
      %p148 = scmp.eq.s32.totalorder %s23, 0
      %p149 = por %p147, %p148
      %p150 = scmp.ne.s32.totalorder %s138, %s139
      %p151 = scmp.eq.s32.totalorder %s24, 1
      %p152 = por %p150, %p151
      %p154 = scmp.ne.s32.totalorder %s139, %s153
      %p155 = scmp.eq.s32.totalorder %s24, 0
      %p156 = por %p154, %p155
      %s158 = sadd.s32 %s157, 1
      %p161 = scmp.eq.s32.totalorder %s18, 1
      %p162 = scmp.ne.s32.totalorder %s157, %s159
      %p163 = scmp.eq.s32.totalorder %s18, 0
      %p164 = por %p162, %p163
      %p165 = scmp.ne.s32.totalorder %s157, %s159
      %p166 = scmp.eq.s32.totalorder %s23, 1
      %p167 = por %p165, %p166
      %p168 = scmp.ne.s32.totalorder %s159, %s160
      %p169 = scmp.eq.s32.totalorder %s23, 0
      %p170 = por %p168, %p169
      %p171 = scmp.ne.s32.totalorder %s159, %s160
      %p172 = scmp.eq.s32.totalorder %s24, 1
      %p173 = por %p171, %p172
      %p175 = scmp.ne.s32.totalorder %s160, %s174
      %p176 = scmp.eq.s32.totalorder %s24, 0
      %p177 = por %p175, %p176
      %s178 = ssub.s32 %s18, %s25
      %p179 = scmp.eq.s32.totalorder %s178, 0
      %s181 = sadd.s32 %s180, 1
      %s182 = scalar_select %p179, %s180, %s181
      %p185 = pneg %p179
      %p186 = scmp.eq.s32.totalorder %s18, 1
      %p187 = por %p185, %p186
      %p188 = scmp.ne.s32.totalorder %s180, %s183
      %p189 = scmp.eq.s32.totalorder %s18, 0
      %p190 = por %p188, %p189
      %p191 = scmp.ne.s32.totalorder %s180, %s183
      %p192 = scmp.eq.s32.totalorder %s23, 1
      %p193 = por %p191, %p192
      %p194 = scmp.ne.s32.totalorder %s183, %s184
      %p195 = scmp.eq.s32.totalorder %s23, 0
      %p196 = por %p194, %p195
      %p197 = scmp.ne.s32.totalorder %s183, %s184
      %p198 = scmp.eq.s32.totalorder %s24, 1
      %p199 = por %p197, %p198
      %p201 = scmp.ne.s32.totalorder %s184, %s200
      %p202 = scmp.eq.s32.totalorder %s24, 0
      %p203 = por %p201, %p202
      %p204 = scmp.le.s32.totalorder 1, %s18
      %p205 = scmp.lt.s32.totalorder %s18, 3
      %p206 = pnand %p204, %p205
      %p207 = pneg %p206
      // Predicated region
      $region9: #{tpu_custom_call.1} parent=5 // pred_check
        _
      $region10: #{tpu_custom_call.1} parent=5 // pred_check_branch
        %209 = sbr.rel (%p206) target = $region12
      $region11: #{tpu_custom_call.1} parent=5 // pred_region
        %s210 = ssub.s32 %s18, 1
        // Predicated region
        $region13: #{tpu_custom_call.1} parent=11 // pred_check
          %p211 = pneg %p65
        $region14: #{tpu_custom_call.1} parent=11 // pred_check_branch
          %213 = sbr.rel (%p211) target = $region16
        $region15: #{tpu_custom_call.1} parent=11 // pred_region
          _
        $region16: #{tpu_custom_call.1} parent=11 // pred_fallthru
          _
        // Predicated region
        $region17: #{tpu_custom_call.1} parent=11 // pred_check
          %p214 = pneg %p86
        $region18: #{tpu_custom_call.1} parent=11 // pred_check_branch
          %216 = sbr.rel (%p214) target = $region20
        $region19: #{tpu_custom_call.1} parent=11 // pred_region
          _
        $region20: #{tpu_custom_call.1} parent=11 // pred_fallthru
          _
        // Predicated region
        $region21: #{tpu_custom_call.1} parent=11 // pred_check
          %p217 = pneg %p107
        $region22: #{tpu_custom_call.1} parent=11 // pred_check_branch
          %219 = sbr.rel (%p217) target = $region24
        $region23: #{tpu_custom_call.1} parent=11 // pred_region
          _
        $region24: #{tpu_custom_call.1} parent=11 // pred_fallthru
          _
        // Predicated region
        $region25: #{tpu_custom_call.1} parent=11 // pred_check
          %p220 = pneg %p128
        $region26: #{tpu_custom_call.1} parent=11 // pred_check_branch
          %222 = sbr.rel (%p220) target = $region28
        $region27: #{tpu_custom_call.1} parent=11 // pred_region
          _
        $region28: #{tpu_custom_call.1} parent=11 // pred_fallthru
          _
        // Predicated region
        $region29: #{tpu_custom_call.1} parent=11 // pred_check
          %p223 = pneg %p149
        $region30: #{tpu_custom_call.1} parent=11 // pred_check_branch
          %225 = sbr.rel (%p223) target = $region32
        $region31: #{tpu_custom_call.1} parent=11 // pred_region
          _
        $region32: #{tpu_custom_call.1} parent=11 // pred_fallthru
          _
        // Predicated region
        $region33: #{tpu_custom_call.1} parent=11 // pred_check
          %p226 = pneg %p170
        $region34: #{tpu_custom_call.1} parent=11 // pred_check_branch
          %228 = sbr.rel (%p226) target = $region36
        $region35: #{tpu_custom_call.1} parent=11 // pred_region
          _
        $region36: #{tpu_custom_call.1} parent=11 // pred_fallthru
          _
      $region12: #{tpu_custom_call.1} parent=5 // pred_fallthru
        _
      %p229 = scmp.lt.s32.totalorder %s18, 2
      // Predicated region
      $region37: #{tpu_custom_call.1} parent=5 // pred_check
        %p230 = pneg %p229
      $region38: #{tpu_custom_call.1} parent=5 // pred_check_branch
        %232 = sbr.rel (%p230) target = $region40
      $region39: #{tpu_custom_call.1} parent=5 // pred_region
        // Predicated region
        $region41: #{tpu_custom_call.1} parent=39 // pred_check
          %p233 = pneg %p38
        $region42: #{tpu_custom_call.1} parent=39 // pred_check_branch
          %235 = sbr.rel (%p233) target = $region44
        $region43: #{tpu_custom_call.1} parent=39 // pred_region
          %s236 = smul.u32 32, %s18
          %p237 = scmp.lt.s32.totalorder %s236, 63
          %s238 = scalar_select %p237, %s236, 63
          %s239 = smul.addr %s238, 8
          %s240 = scalar_lea.vmem %s0, %s239
          %s241 = smul.u32 32, %s18
        $region44: #{tpu_custom_call.1} parent=39 // pred_fallthru
          _
      $region40: #{tpu_custom_call.1} parent=5 // pred_fallthru
        _
      %p242 = scmp.le.s32.totalorder 1, %s18
      %p243 = scmp.lt.s32.totalorder %s18, 3
      %p244 = pnand %p242, %p243
      %p245 = pneg %p244
      // Predicated region
      $region45: #{tpu_custom_call.1} parent=5 // pred_check
        _
      $region46: #{tpu_custom_call.1} parent=5 // pred_check_branch
        %247 = sbr.rel (%p244) target = $region48
      $region47: #{tpu_custom_call.1} parent=5 // pred_region
        %s248 = ssub.s32 %s18, 1
        %s249 = smul.u32 32, %s23
        %p250 = scmp.lt.s32.totalorder %s249, 63
        %s251 = scalar_select %p250, %s249, 63
        %s252 = smul.addr %s251, 8
        %s253 = scalar_lea.vmem %s0, %s252
        %p254 = pneg %p44
        %p255 = pneg %p41
        %p256 = pneg %p65
        %p257 = pneg %p62
        %p258 = pneg %p86
        %p259 = pneg %p83
        %p260 = pneg %p107
        %p261 = pneg %p104
        %p262 = pneg %p128
        %p263 = pneg %p125
        %p264 = pneg %p149
        %p265 = pneg %p146
        %p266 = pneg %p170
        %p267 = pneg %p167
        %p268 = pneg %p196
        %p269 = pneg %p193
        %s270 = sand.u32 %s183, 1
        %s271 = scalar_lea.sflag [#allocation4], %s270
        %s272 = sand.u32 %s183, 1
        %s273 = smul.addr %s272, 2
        %s274 = scalar_lea.vmem [#allocation3], %s273
        %s275 = smul.u32 32, %s23
        %p276 = scmp.lt.s32.totalorder %s275, 63
        %s277 = scalar_select %p276, %s275, 63
        %s278 = smul.addr %s277, 8
        %s279 = scalar_lea.vmem %s0, %s278
        %s280 = smul.u32 32, %s23
        %v281 = vld [vmem:[%s279] sm:$0xff]
        %v282 = vld [vmem:[%s279 + $0x8] sm:$0xff]
        %v283 = vld [vmem:[%s279 + $0x10] sm:$0xff]
        %v284 = vld [vmem:[%s279 + $0x18] sm:$0xff]
        %v285 = vld [vmem:[%s279 + $0x20] sm:$0xff]
        %v286 = vld [vmem:[%s279 + $0x28] sm:$0xff]
        %v287 = vld [vmem:[%s279 + $0x30] sm:$0xff]
        %v288 = vld [vmem:[%s279 + $0x38] sm:$0xff]
        %v289 = vld [vmem:[%s279 + $0x40] sm:$0xff]
        %v290 = vld [vmem:[%s279 + $0x48] sm:$0xff]
        %v291 = vld [vmem:[%s279 + $0x50] sm:$0xff]
        %v292 = vld [vmem:[%s279 + $0x58] sm:$0xff]
        %v293 = vld [vmem:[%s279 + $0x60] sm:$0xff]
        %v294 = vld [vmem:[%s279 + $0x68] sm:$0xff]
        %v295 = vld [vmem:[%s279 + $0x70] sm:$0xff]
        %v296 = vld [vmem:[%s279 + $0x78] sm:$0xff]
        %v297 = vld [vmem:[%s279 + $0x80] sm:$0xff]
        %v298 = vld [vmem:[%s279 + $0x88] sm:$0xff]
        %v299 = vld [vmem:[%s279 + $0x90] sm:$0xff]
        %v300 = vld [vmem:[%s279 + $0x98] sm:$0xff]
        %v301 = vld [vmem:[%s279 + $0xa0] sm:$0xff]
        %v302 = vld [vmem:[%s279 + $0xa8] sm:$0xff]
        %v303 = vld [vmem:[%s279 + $0xb0] sm:$0xff]
        %v304 = vld [vmem:[%s279 + $0xb8] sm:$0xff]
        %v305 = vld [vmem:[%s279 + $0xc0] sm:$0xff]
        %v306 = vld [vmem:[%s279 + $0xc8] sm:$0xff]
        %v307 = vld [vmem:[%s279 + $0xd0] sm:$0xff]
        %v308 = vld [vmem:[%s279 + $0xd8] sm:$0xff]
        %v309 = vld [vmem:[%s279 + $0xe0] sm:$0xff]
        %v310 = vld [vmem:[%s279 + $0xe8] sm:$0xff]
        %v311 = vld [vmem:[%s279 + $0xf0] sm:$0xff]
        %v312 = vld [vmem:[%s279 + $0xf8] sm:$0xff]
        %v313 = vld [vmem:[%s1] sm:$0xff]
        %v314 = vld [vmem:[%s1 + $0x8] sm:$0xff]
        %v315 = vld [vmem:[%s2] sm:$0x1]
        %v317 = vperm.slane %v315, 0
        %vm319 = vcmask 130048
        %v321 = vsel %vm319, %v281, 0
        %v324 = vsel %vm319, %v282, 0
        %v327 = vsel %vm319, %v283, 0
        %v330 = vsel %vm319, %v284, 0
        %v333 = vsel %vm319, %v285, 0
        %v336 = vsel %vm319, %v286, 0
        %v339 = vsel %vm319, %v287, 0
        %v342 = vsel %vm319, %v288, 0
        %v345 = vsel %vm319, %v289, 0
        %v348 = vsel %vm319, %v290, 0
        %v351 = vsel %vm319, %v291, 0
        %v354 = vsel %vm319, %v292, 0
        %v357 = vsel %vm319, %v293, 0
        %v360 = vsel %vm319, %v294, 0
        %v363 = vsel %vm319, %v295, 0
        %v366 = vsel %vm319, %v296, 0
        %v369 = vsel %vm319, %v297, 0
        %v372 = vsel %vm319, %v298, 0
        %v375 = vsel %vm319, %v299, 0
        %v378 = vsel %vm319, %v300, 0
        %v381 = vsel %vm319, %v301, 0
        %v384 = vsel %vm319, %v302, 0
        %v387 = vsel %vm319, %v303, 0
        %v390 = vsel %vm319, %v304, 0
        %v393 = vsel %vm319, %v305, 0
        %v396 = vsel %vm319, %v306, 0
        %v399 = vsel %vm319, %v307, 0
        %v402 = vsel %vm319, %v308, 0
        %v405 = vsel %vm319, %v309, 0
        %v408 = vsel %vm319, %v310, 0
        %v411 = vsel %vm319, %v311, 0
        %v414 = vsel %vm319, %v312, 0
        %416 = vmatpush.msra.mxu0 0.0
        %417 = vmatpush.msra.mxu0 0.0
        %418 = vmatpush.msra.mxu0 0.0
        %419 = vmatpush.msra.mxu0 0.0
        %420 = vmatpush.msra.mxu0 0.0
        %421 = vmatpush.msra.mxu0 0.0
        %422 = vmatpush.msra.mxu0 0.0
        %423 = vmatpush.msra.mxu0 0.0
        %424 = vmatpush.msra.mxu0 0.0
        %425 = vmatpush.msra.mxu0 0.0
        %426 = vmatpush.msra.mxu0 0.0
        %427 = vmatpush.msra.mxu0 0.0
        %428 = vmatpush.msra.mxu0 0.0
        %429 = vmatpush.msra.mxu0 0.0
        %430 = vmatpush.msra.mxu0 %v314
        %431 = vmatpush.msra.mxu0 %v313
        %432 = vmatmul.f32.gmra.mxu0 %v321
        %v433 = vpop.f32.mrf.mxu0
        %v434 = vadd.f32 %v317, %v433
        %435 = vmatmul.f32.gmra.mxu0 %v324
        %v436 = vpop.f32.mrf.mxu0
        %v437 = vadd.f32 %v317, %v436
        %438 = vmatmul.f32.gmra.mxu0 %v327
        %v439 = vpop.f32.mrf.mxu0
        %v440 = vadd.f32 %v317, %v439
        %441 = vmatmul.f32.gmra.mxu0 %v330
        %v442 = vpop.f32.mrf.mxu0
        %v443 = vadd.f32 %v317, %v442
        %444 = vmatmul.f32.gmra.mxu0 %v333
        %v445 = vpop.f32.mrf.mxu0
        %v446 = vadd.f32 %v317, %v445
        %447 = vmatmul.f32.gmra.mxu0 %v336
        %v448 = vpop.f32.mrf.mxu0
        %v449 = vadd.f32 %v317, %v448
        %450 = vmatmul.f32.gmra.mxu0 %v339
        %v451 = vpop.f32.mrf.mxu0
        %v452 = vadd.f32 %v317, %v451
        %453 = vmatmul.f32.gmra.mxu0 %v342
        %v454 = vpop.f32.mrf.mxu0
        %v455 = vadd.f32 %v317, %v454
        %456 = vmatmul.f32.gmra.mxu0 %v345
        %v457 = vpop.f32.mrf.mxu0
        %v458 = vadd.f32 %v317, %v457
        %459 = vmatmul.f32.gmra.mxu0 %v348
        %v460 = vpop.f32.mrf.mxu0
        %v461 = vadd.f32 %v317, %v460
        %462 = vmatmul.f32.gmra.mxu0 %v351
        %v463 = vpop.f32.mrf.mxu0
        %v464 = vadd.f32 %v317, %v463
        %465 = vmatmul.f32.gmra.mxu0 %v354
        %v466 = vpop.f32.mrf.mxu0
        %v467 = vadd.f32 %v317, %v466
        %468 = vmatmul.f32.gmra.mxu0 %v357
        %v469 = vpop.f32.mrf.mxu0
        %v470 = vadd.f32 %v317, %v469
        %471 = vmatmul.f32.gmra.mxu0 %v360
        %v472 = vpop.f32.mrf.mxu0
        %v473 = vadd.f32 %v317, %v472
        %474 = vmatmul.f32.gmra.mxu0 %v363
        %v475 = vpop.f32.mrf.mxu0
        %v476 = vadd.f32 %v317, %v475
        %477 = vmatmul.f32.gmra.mxu0 %v366
        %v478 = vpop.f32.mrf.mxu0
        %v479 = vadd.f32 %v317, %v478
        %480 = vmatmul.f32.gmra.mxu0 %v369
        %v481 = vpop.f32.mrf.mxu0
        %v482 = vadd.f32 %v317, %v481
        %483 = vmatmul.f32.gmra.mxu0 %v372
        %v484 = vpop.f32.mrf.mxu0
        %v485 = vadd.f32 %v317, %v484
        %486 = vmatmul.f32.gmra.mxu0 %v375
        %v487 = vpop.f32.mrf.mxu0
        %v488 = vadd.f32 %v317, %v487
        %489 = vmatmul.f32.gmra.mxu0 %v378
        %v490 = vpop.f32.mrf.mxu0
        %v491 = vadd.f32 %v317, %v490
        %492 = vmatmul.f32.gmra.mxu0 %v381
        %v493 = vpop.f32.mrf.mxu0
        %v494 = vadd.f32 %v317, %v493
        %495 = vmatmul.f32.gmra.mxu0 %v384
        %v496 = vpop.f32.mrf.mxu0
        %v497 = vadd.f32 %v317, %v496
        %498 = vmatmul.f32.gmra.mxu0 %v387
        %v499 = vpop.f32.mrf.mxu0
        %v500 = vadd.f32 %v317, %v499
        %501 = vmatmul.f32.gmra.mxu0 %v390
        %v502 = vpop.f32.mrf.mxu0
        %v503 = vadd.f32 %v317, %v502
        %504 = vmatmul.f32.gmra.mxu0 %v393
        %v505 = vpop.f32.mrf.mxu0
        %v506 = vadd.f32 %v317, %v505
        %507 = vmatmul.f32.gmra.mxu0 %v396
        %v508 = vpop.f32.mrf.mxu0
        %v509 = vadd.f32 %v317, %v508
        %510 = vmatmul.f32.gmra.mxu0 %v399
        %v511 = vpop.f32.mrf.mxu0
        %v512 = vadd.f32 %v317, %v511
        %513 = vmatmul.f32.gmra.mxu0 %v402
        %v514 = vpop.f32.mrf.mxu0
        %v515 = vadd.f32 %v317, %v514
        %516 = vmatmul.f32.gmra.mxu0 %v405
        %v517 = vpop.f32.mrf.mxu0
        %v518 = vadd.f32 %v317, %v517
        %519 = vmatmul.f32.gmra.mxu0 %v408
        %v520 = vpop.f32.mrf.mxu0
        %v521 = vadd.f32 %v317, %v520
        %522 = vmatmul.f32.gmra.mxu0 %v411
        %v523 = vpop.f32.mrf.mxu0
        %v524 = vadd.f32 %v317, %v523
        %525 = vmatmul.f32.gmra.mxu0 %v414
        %v526 = vpop.f32.mrf.mxu0
        %v527 = vadd.f32 %v317, %v526
        %528 = vdwg.mxu0
        %v529 = vmax.f32 %v434, 0.0
        %v530 = vmax.f32 %v437, 0.0
        %v531 = vmax.f32 %v440, 0.0
        %v532 = vmax.f32 %v443, 0.0
        %v533 = vmax.f32 %v446, 0.0
        %v534 = vmax.f32 %v449, 0.0
        %v535 = vmax.f32 %v452, 0.0
        %v536 = vmax.f32 %v455, 0.0
        %v537 = vmax.f32 %v458, 0.0
        %v538 = vmax.f32 %v461, 0.0
        %v539 = vmax.f32 %v464, 0.0
        %v540 = vmax.f32 %v467, 0.0
        %v541 = vmax.f32 %v470, 0.0
        %v542 = vmax.f32 %v473, 0.0
        %v543 = vmax.f32 %v476, 0.0
        %v544 = vmax.f32 %v479, 0.0
        %v545 = vmax.f32 %v482, 0.0
        %v546 = vmax.f32 %v485, 0.0
        %v547 = vmax.f32 %v488, 0.0
        %v548 = vmax.f32 %v491, 0.0
        %v549 = vmax.f32 %v494, 0.0
        %v550 = vmax.f32 %v497, 0.0
        %v551 = vmax.f32 %v500, 0.0
        %v552 = vmax.f32 %v503, 0.0
        %v553 = vmax.f32 %v506, 0.0
        %v554 = vmax.f32 %v509, 0.0
        %v555 = vmax.f32 %v512, 0.0
        %v556 = vmax.f32 %v515, 0.0
        %v557 = vmax.f32 %v518, 0.0
        %v558 = vmax.f32 %v521, 0.0
        %v559 = vmax.f32 %v524, 0.0
        %v560 = vmax.f32 %v527, 0.0
        %v561 = vld [vmem:[%s3] sm:$0xff]
        %v562 = vld [vmem:[%s3 + $0x8] sm:$0xff]
        %v563 = vld [vmem:[%s3 + $0x10] sm:$0xff]
        %v564 = vld [vmem:[%s3 + $0x18] sm:$0xff]
        %v565 = vld [vmem:[%s3 + $0x20] sm:$0xff]
        %v566 = vld [vmem:[%s3 + $0x28] sm:$0xff]
        %v567 = vld [vmem:[%s3 + $0x30] sm:$0xff]
        %v568 = vld [vmem:[%s3 + $0x38] sm:$0xff]
        %v569 = vld [vmem:[%s3 + $0x40] sm:$0xff]
        %v570 = vld [vmem:[%s3 + $0x48] sm:$0xff]
        %v571 = vld [vmem:[%s3 + $0x50] sm:$0xff]
        %v572 = vld [vmem:[%s3 + $0x58] sm:$0xff]
        %v573 = vld [vmem:[%s3 + $0x60] sm:$0xff]
        %v574 = vld [vmem:[%s3 + $0x68] sm:$0xff]
        %v575 = vld [vmem:[%s3 + $0x70] sm:$0xff]
        %v576 = vld [vmem:[%s3 + $0x78] sm:$0xff]
        %v577 = vld [vmem:[%s4] sm:$0x1]
        %v579 = vperm.slane %v577, 0
        %581 = vmatpush.msra.mxu0 %v576
        %582 = vmatpush.msra.mxu0 %v575
        %583 = vmatpush.msra.mxu0 %v574
        %584 = vmatpush.msra.mxu0 %v573
        %585 = vmatpush.msra.mxu0 %v572
        %586 = vmatpush.msra.mxu0 %v571
        %587 = vmatpush.msra.mxu0 %v570
        %588 = vmatpush.msra.mxu0 %v569
        %589 = vmatpush.msra.mxu0 %v568
        %590 = vmatpush.msra.mxu0 %v567
        %591 = vmatpush.msra.mxu0 %v566
        %592 = vmatpush.msra.mxu0 %v565
        %593 = vmatpush.msra.mxu0 %v564
        %594 = vmatpush.msra.mxu0 %v563
        %595 = vmatpush.msra.mxu0 %v562
        %596 = vmatpush.msra.mxu0 %v561
        %597 = vmatmul.f32.gmra.mxu0 %v529
        %v598 = vpop.f32.mrf.mxu0
        %v599 = vadd.f32 %v579, %v598
        %600 = vmatmul.f32.gmra.mxu0 %v530
        %v601 = vpop.f32.mrf.mxu0
        %v602 = vadd.f32 %v579, %v601
        %603 = vmatmul.f32.gmra.mxu0 %v531
        %v604 = vpop.f32.mrf.mxu0
        %v605 = vadd.f32 %v579, %v604
        %606 = vmatmul.f32.gmra.mxu0 %v532
        %v607 = vpop.f32.mrf.mxu0
        %v608 = vadd.f32 %v579, %v607
        %609 = vmatmul.f32.gmra.mxu0 %v533
        %v610 = vpop.f32.mrf.mxu0
        %v611 = vadd.f32 %v579, %v610
        %612 = vmatmul.f32.gmra.mxu0 %v534
        %v613 = vpop.f32.mrf.mxu0
        %v614 = vadd.f32 %v579, %v613
        %615 = vmatmul.f32.gmra.mxu0 %v535
        %v616 = vpop.f32.mrf.mxu0
        %v617 = vadd.f32 %v579, %v616
        %618 = vmatmul.f32.gmra.mxu0 %v536
        %v619 = vpop.f32.mrf.mxu0
        %v620 = vadd.f32 %v579, %v619
        %621 = vmatmul.f32.gmra.mxu0 %v537
        %v622 = vpop.f32.mrf.mxu0
        %v623 = vadd.f32 %v579, %v622
        %624 = vmatmul.f32.gmra.mxu0 %v538
        %v625 = vpop.f32.mrf.mxu0
        %v626 = vadd.f32 %v579, %v625
        %627 = vmatmul.f32.gmra.mxu0 %v539
        %v628 = vpop.f32.mrf.mxu0
        %v629 = vadd.f32 %v579, %v628
        %630 = vmatmul.f32.gmra.mxu0 %v540
        %v631 = vpop.f32.mrf.mxu0
        %v632 = vadd.f32 %v579, %v631
        %633 = vmatmul.f32.gmra.mxu0 %v541
        %v634 = vpop.f32.mrf.mxu0
        %v635 = vadd.f32 %v579, %v634
        %636 = vmatmul.f32.gmra.mxu0 %v542
        %v637 = vpop.f32.mrf.mxu0
        %v638 = vadd.f32 %v579, %v637
        %639 = vmatmul.f32.gmra.mxu0 %v543
        %v640 = vpop.f32.mrf.mxu0
        %v641 = vadd.f32 %v579, %v640
        %642 = vmatmul.f32.gmra.mxu0 %v544
        %v643 = vpop.f32.mrf.mxu0
        %v644 = vadd.f32 %v579, %v643
        %645 = vmatmul.f32.gmra.mxu0 %v545
        %v646 = vpop.f32.mrf.mxu0
        %v647 = vadd.f32 %v579, %v646
        %648 = vmatmul.f32.gmra.mxu0 %v546
        %v649 = vpop.f32.mrf.mxu0
        %v650 = vadd.f32 %v579, %v649
        %651 = vmatmul.f32.gmra.mxu0 %v547
        %v652 = vpop.f32.mrf.mxu0
        %v653 = vadd.f32 %v579, %v652
        %654 = vmatmul.f32.gmra.mxu0 %v548
        %v655 = vpop.f32.mrf.mxu0
        %v656 = vadd.f32 %v579, %v655
        %657 = vmatmul.f32.gmra.mxu0 %v549
        %v658 = vpop.f32.mrf.mxu0
        %v659 = vadd.f32 %v579, %v658
        %660 = vmatmul.f32.gmra.mxu0 %v550
        %v661 = vpop.f32.mrf.mxu0
        %v662 = vadd.f32 %v579, %v661
        %663 = vmatmul.f32.gmra.mxu0 %v551
        %v664 = vpop.f32.mrf.mxu0
        %v665 = vadd.f32 %v579, %v664
        %666 = vmatmul.f32.gmra.mxu0 %v552
        %v667 = vpop.f32.mrf.mxu0
        %v668 = vadd.f32 %v579, %v667
        %669 = vmatmul.f32.gmra.mxu0 %v553
        %v670 = vpop.f32.mrf.mxu0
        %v671 = vadd.f32 %v579, %v670
        %672 = vmatmul.f32.gmra.mxu0 %v554
        %v673 = vpop.f32.mrf.mxu0
        %v674 = vadd.f32 %v579, %v673
        %675 = vmatmul.f32.gmra.mxu0 %v555
        %v676 = vpop.f32.mrf.mxu0
        %v677 = vadd.f32 %v579, %v676
        %678 = vmatmul.f32.gmra.mxu0 %v556
        %v679 = vpop.f32.mrf.mxu0
        %v680 = vadd.f32 %v579, %v679
        %681 = vmatmul.f32.gmra.mxu0 %v557
        %v682 = vpop.f32.mrf.mxu0
        %v683 = vadd.f32 %v579, %v682
        %684 = vmatmul.f32.gmra.mxu0 %v558
        %v685 = vpop.f32.mrf.mxu0
        %v686 = vadd.f32 %v579, %v685
        %687 = vmatmul.f32.gmra.mxu0 %v559
        %v688 = vpop.f32.mrf.mxu0
        %v689 = vadd.f32 %v579, %v688
        %690 = vmatmul.f32.gmra.mxu0 %v560
        %v691 = vpop.f32.mrf.mxu0
        %v692 = vadd.f32 %v579, %v691
        %693 = vdwg.mxu0
        %v694 = vmax.f32 %v599, 0.0
        %v695 = vmax.f32 %v602, 0.0
        %v696 = vmax.f32 %v605, 0.0
        %v697 = vmax.f32 %v608, 0.0
        %v698 = vmax.f32 %v611, 0.0
        %v699 = vmax.f32 %v614, 0.0
        %v700 = vmax.f32 %v617, 0.0
        %v701 = vmax.f32 %v620, 0.0
        %v702 = vmax.f32 %v623, 0.0
        %v703 = vmax.f32 %v626, 0.0
        %v704 = vmax.f32 %v629, 0.0
        %v705 = vmax.f32 %v632, 0.0
        %v706 = vmax.f32 %v635, 0.0
        %v707 = vmax.f32 %v638, 0.0
        %v708 = vmax.f32 %v641, 0.0
        %v709 = vmax.f32 %v644, 0.0
        %v710 = vmax.f32 %v647, 0.0
        %v711 = vmax.f32 %v650, 0.0
        %v712 = vmax.f32 %v653, 0.0
        %v713 = vmax.f32 %v656, 0.0
        %v714 = vmax.f32 %v659, 0.0
        %v715 = vmax.f32 %v662, 0.0
        %v716 = vmax.f32 %v665, 0.0
        %v717 = vmax.f32 %v668, 0.0
        %v718 = vmax.f32 %v671, 0.0
        %v719 = vmax.f32 %v674, 0.0
        %v720 = vmax.f32 %v677, 0.0
        %v721 = vmax.f32 %v680, 0.0
        %v722 = vmax.f32 %v683, 0.0
        %v723 = vmax.f32 %v686, 0.0
        %v724 = vmax.f32 %v689, 0.0
        %v725 = vmax.f32 %v692, 0.0
        %v726 = vld [vmem:[%s5] sm:$0x1]
        %v727 = vld [vmem:[#allocation2] sm:$0x1]
        %729 = vset.pattern.permute.xlu0 0
        %730 = vperm.xlu0 %729, %v727
        %v731 = vpop.permute.xlu0 %730
        %v733 = vperm.slane %v731, 0
        %734 = vmatpush.xpose.msra.mxu0 %v709
        %735 = vmatpush.xpose.msra.mxu0 %v708
        %736 = vmatpush.xpose.msra.mxu0 %v707
        %737 = vmatpush.xpose.msra.mxu0 %v706
        %738 = vmatpush.xpose.msra.mxu0 %v705
        %739 = vmatpush.xpose.msra.mxu0 %v704
        %740 = vmatpush.xpose.msra.mxu0 %v703
        %741 = vmatpush.xpose.msra.mxu0 %v702
        %742 = vmatpush.xpose.msra.mxu0 %v701
        %743 = vmatpush.xpose.msra.mxu0 %v700
        %744 = vmatpush.xpose.msra.mxu0 %v699
        %745 = vmatpush.xpose.msra.mxu0 %v698
        %746 = vmatpush.xpose.msra.mxu0 %v697
        %747 = vmatpush.xpose.msra.mxu0 %v696
        %748 = vmatpush.xpose.msra.mxu0 %v695
        %749 = vmatpush.xpose.msra.mxu0 %v694
        %750 = vmatmul.f32.gmra.mxu0 %v726
        %v751 = vpop.f32.mrf.mxu0
        %v752 = vadd.f32 %v733, %v751
        %753 = vdwg.mxu0
        %754 = vmatpush.xpose.msra.mxu0 %v725
        %755 = vmatpush.xpose.msra.mxu0 %v724
        %756 = vmatpush.xpose.msra.mxu0 %v723
        %757 = vmatpush.xpose.msra.mxu0 %v722
        %758 = vmatpush.xpose.msra.mxu0 %v721
        %759 = vmatpush.xpose.msra.mxu0 %v720
        %760 = vmatpush.xpose.msra.mxu0 %v719
        %761 = vmatpush.xpose.msra.mxu0 %v718
        %762 = vmatpush.xpose.msra.mxu0 %v717
        %763 = vmatpush.xpose.msra.mxu0 %v716
        %764 = vmatpush.xpose.msra.mxu0 %v715
        %765 = vmatpush.xpose.msra.mxu0 %v714
        %766 = vmatpush.xpose.msra.mxu0 %v713
        %767 = vmatpush.xpose.msra.mxu0 %v712
        %768 = vmatpush.xpose.msra.mxu0 %v711
        %769 = vmatpush.xpose.msra.mxu0 %v710
        %770 = vmatmul.f32.gmra.mxu0 %v726
        %v771 = vpop.f32.mrf.mxu0
        %v772 = vadd.f32 %v733, %v771
        %773 = vdwg.mxu0
        %v776 = vrot.slane %v772, 7
        %vm777 = vcmask 1040384
        %v778 = vsel %vm777, %v752, %v776
        %v780 = vlaneseq
        %vm781 = vcmp.ge.s32.totalorder %v780, 0
        %vm782 = vcmp.lt.s32.totalorder %v780, 256
        %vm783 = vmand %vm781, %vm782
        %784 = vst.msk [vmem:[%s274] sm:$0x3] %vm783, %v778
        %s785 = sand.u32 %s183, 1
        %s786 = scalar_lea.sflag [#allocation4], %s785
        %s787 = sand.u32 %s183, 1
        %s788 = smul.addr %s787, 2
        %s789 = scalar_lea.vmem [#allocation3], %s788
        // Predicated region
        $region49: #{tpu_custom_call.1} parent=47 // pred_check
          %p790 = pneg %p193
        $region50: #{tpu_custom_call.1} parent=47 // pred_check_branch
          %792 = sbr.rel (%p790) target = $region52
        $region51: #{tpu_custom_call.1} parent=47 // pred_region
          %794 = vsyncadd %s786, 0
          %s795 = smul.addr %s23, 2
          %s796 = scalar_lea.hbm %s7, %s795
          %s798 = sshll.u32 %s789, 4
          %s799 = int_to_ptr.vmem [resolvable:$true] %s798
          %s800 = sshll.u32 %s796, 4
          %s801 = int_to_ptr.hbm [resolvable:$true] %s800
          %803 = dma.vmem_to_hbm [thread:$0]  %s799, 32, %s801, %s786
        $region52: #{tpu_custom_call.1} parent=47 // pred_fallthru
          _
      $region48: #{tpu_custom_call.1} parent=5 // pred_fallthru
        _
      %p804 = scmp.le.s32.totalorder 2, %s18
      // Predicated region
      $region53: #{tpu_custom_call.1} parent=5 // pred_check
        %p805 = pneg %p804
      $region54: #{tpu_custom_call.1} parent=5 // pred_check_branch
        %807 = sbr.rel (%p805) target = $region56
      $region55: #{tpu_custom_call.1} parent=5 // pred_region
        %s808 = ssub.s32 %s18, 2
        // Predicated region
        $region57: #{tpu_custom_call.1} parent=55 // pred_check
          %p809 = pneg %p199
        $region58: #{tpu_custom_call.1} parent=55 // pred_check_branch
          %811 = sbr.rel (%p809) target = $region60
        $region59: #{tpu_custom_call.1} parent=55 // pred_region
          %s812 = sand.u32 %s184, 1
          %s813 = scalar_lea.sflag [#allocation4], %s812
          %s814 = sand.u32 %s184, 1
          %s815 = smul.addr %s814, 2
          %s816 = scalar_lea.vmem [#allocation3], %s815
          %818 = dma.done %s813, 32
        $region60: #{tpu_custom_call.1} parent=55 // pred_fallthru
          _
      $region56: #{tpu_custom_call.1} parent=5 // pred_fallthru
        _
    $region6: #{tpu_custom_call.1} parent=1 // loop_footer
      %s22 = sadd.s32 1, %s18
    $region7: #{tpu_custom_call.1} parent=1 // loop_footer_branch
      %17 = sbr.rel target = $region3
    $region8: #{tpu_custom_call.1} parent=1 // loop_exit
      _
    %819 = vsyncpa [#allocation4], 1
    %s820 = scalar_lea.sflag [#allocation4], 1
    %821 = vsyncpa %s820, 1

// kernel: tpu_custom_call.1
$region0: #{tpu_custom_call.1}
  #allocation0 [shape = 'u32[]', space=smem, size = 0x4, offset = 0x4, fixed_abs, tag = 'smem constant byte address 0x4 - core index']
  #allocation1 [shape = 'u32[72,128]{1,0:T(1,128)}', space=vmem, size = 0x9000, scoped, tag = 'internal scratch']
  #allocation2 [shape = 'f32[1,1]{1,0:T(1,128)S(1)}', space=vmem, size = 0x200, scoped, tag = 'scoped memory for tpu_custom_call.1']
  %s0 = inlined_call_operand.vmem [shape: f32[512,16], index: 0, kind: input, shape index: {}]
  %s1 = inlined_call_operand.vmem [shape: f32[16,128], index: 1, kind: input, shape index: {}]
  %s2 = inlined_call_operand.vmem [shape: f32[1,128], index: 2, kind: input, shape index: {}]
  %s3 = inlined_call_operand.vmem [shape: f32[128,128], index: 3, kind: input, shape index: {}]
  %s4 = inlined_call_operand.vmem [shape: f32[1,128], index: 4, kind: input, shape index: {}]
  %s5 = inlined_call_operand.vmem [shape: f32[1,128], index: 5, kind: input, shape index: {}]
  %s6 = inlined_call_operand.<no memory space> [shape: f32[1,1], index: 6, kind: input, shape index: {}]
  %s7 = inlined_call_operand.hbm [shape: f32[2,1,256], index: 7, kind: output, shape index: {}]
  %s8 = sld [smem:[#allocation0]]
  $region61: #{tpu_custom_call.1} parent=0
    _
  %s10 = ssub.s32 1, %s8
  %s11 = scalar_select 0, %s10, %s8
  %v12 = vstv %s6
  %13 = vst [vmem:[#allocation2] sm:$0x1] %v12
  $region1: #{tpu_custom_call.1} parent=0
    #allocation3 [shape = 'u8[2048]{0}', space=vmem, size = 0x800, scoped, tag = 'output window, operand 0']
    #allocation4 [shape = 's32[2]{0}', space=sflag, size = 0x8, scoped, tag = 'scoped memory for tpu_custom_call.1']
    %14 = vsyncpa [#allocation4], 0
    %s15 = scalar_lea.sflag [#allocation4], 1
    %16 = vsyncpa %s15, 0
    loop: start=0, step=1, limit=4
    $region2: #{tpu_custom_call.1} parent=1 // loop_pre_header
      _
    $region3: #{tpu_custom_call.1} parent=1 // loop_header
      %s18 = sphi 0, %s22
      %p19 = scmp.ge.s32.totalorder %s18, 4
      %s28 = sphi 0, %s30
      %s31 = sphi 0, %s28
      %s32 = sphi 0, %s31
      %s48 = sphi 0, %s32
      %s52 = sphi 0, %s52
      %s54 = sphi 0, %s52
      %s55 = sphi 0, %s54
      %s69 = sphi 0, %s55
      %s73 = sphi 0, %s73
      %s75 = sphi 0, %s73
      %s76 = sphi 0, %s75
      %s90 = sphi 0, %s76
      %s94 = sphi 0, %s94
      %s96 = sphi 0, %s94
      %s97 = sphi 0, %s96
      %s111 = sphi 0, %s97
      %s115 = sphi 0, %s115
      %s117 = sphi 0, %s115
      %s118 = sphi 0, %s117
      %s132 = sphi 0, %s118
      %s136 = sphi 0, %s136
      %s138 = sphi 0, %s136
      %s139 = sphi 0, %s138
      %s153 = sphi 0, %s139
      %s157 = sphi 0, %s157
      %s159 = sphi 0, %s157
      %s160 = sphi 0, %s159
      %s174 = sphi 0, %s160
      %s180 = sphi 0, %s182
      %s183 = sphi 0, %s180
      %s184 = sphi 0, %s183
      %s200 = sphi 0, %s184
    $region4: #{tpu_custom_call.1} parent=1 // loop_header_branch
      %21 = sbr.rel (%p19) target = $region8
    $region5: #{tpu_custom_call.1} parent=1 // loop_body
      %s23 = ssub.s32 %s18, 1
      %s24 = ssub.s32 %s18, 2
      %s25 = sadd.s32 %s18, 1
      %s26 = ssub.s32 %s18, %s25
      %p27 = scmp.eq.s32.totalorder %s26, 0
      %s29 = sadd.s32 %s28, 1
      %s30 = scalar_select %p27, %s28, %s29
      %p33 = pneg %p27
      %p34 = scmp.eq.s32.totalorder %s18, 1
      %p35 = por %p33, %p34
      %p36 = scmp.ne.s32.totalorder %s28, %s31
      %p37 = scmp.eq.s32.totalorder %s18, 0
      %p38 = por %p36, %p37
      %p39 = scmp.ne.s32.totalorder %s28, %s31
      %p40 = scmp.eq.s32.totalorder %s23, 1
      %p41 = por %p39, %p40
      %p42 = scmp.ne.s32.totalorder %s31, %s32
      %p43 = scmp.eq.s32.totalorder %s23, 0
      %p44 = por %p42, %p43
      %p45 = scmp.ne.s32.totalorder %s31, %s32
      %p46 = scmp.eq.s32.totalorder %s24, 1
      %p47 = por %p45, %p46
      %p49 = scmp.ne.s32.totalorder %s32, %s48
      %p50 = scmp.eq.s32.totalorder %s24, 0
      %p51 = por %p49, %p50
      %s53 = sadd.s32 %s52, 1
      %p56 = scmp.eq.s32.totalorder %s18, 1
      %p57 = scmp.ne.s32.totalorder %s52, %s54
      %p58 = scmp.eq.s32.totalorder %s18, 0
      %p59 = por %p57, %p58
      %p60 = scmp.ne.s32.totalorder %s52, %s54
      %p61 = scmp.eq.s32.totalorder %s23, 1
      %p62 = por %p60, %p61
      %p63 = scmp.ne.s32.totalorder %s54, %s55
      %p64 = scmp.eq.s32.totalorder %s23, 0
      %p65 = por %p63, %p64
      %p66 = scmp.ne.s32.totalorder %s54, %s55
      %p67 = scmp.eq.s32.totalorder %s24, 1
      %p68 = por %p66, %p67
      %p70 = scmp.ne.s32.totalorder %s55, %s69
      %p71 = scmp.eq.s32.totalorder %s24, 0
      %p72 = por %p70, %p71
      %s74 = sadd.s32 %s73, 1
      %p77 = scmp.eq.s32.totalorder %s18, 1
      %p78 = scmp.ne.s32.totalorder %s73, %s75
      %p79 = scmp.eq.s32.totalorder %s18, 0
      %p80 = por %p78, %p79
      %p81 = scmp.ne.s32.totalorder %s73, %s75
      %p82 = scmp.eq.s32.totalorder %s23, 1
      %p83 = por %p81, %p82
      %p84 = scmp.ne.s32.totalorder %s75, %s76
      %p85 = scmp.eq.s32.totalorder %s23, 0
      %p86 = por %p84, %p85
      %p87 = scmp.ne.s32.totalorder %s75, %s76
      %p88 = scmp.eq.s32.totalorder %s24, 1
      %p89 = por %p87, %p88
      %p91 = scmp.ne.s32.totalorder %s76, %s90
      %p92 = scmp.eq.s32.totalorder %s24, 0
      %p93 = por %p91, %p92
      %s95 = sadd.s32 %s94, 1
      %p98 = scmp.eq.s32.totalorder %s18, 1
      %p99 = scmp.ne.s32.totalorder %s94, %s96
      %p100 = scmp.eq.s32.totalorder %s18, 0
      %p101 = por %p99, %p100
      %p102 = scmp.ne.s32.totalorder %s94, %s96
      %p103 = scmp.eq.s32.totalorder %s23, 1
      %p104 = por %p102, %p103
      %p105 = scmp.ne.s32.totalorder %s96, %s97
      %p106 = scmp.eq.s32.totalorder %s23, 0
      %p107 = por %p105, %p106
      %p108 = scmp.ne.s32.totalorder %s96, %s97
      %p109 = scmp.eq.s32.totalorder %s24, 1
      %p110 = por %p108, %p109
      %p112 = scmp.ne.s32.totalorder %s97, %s111
      %p113 = scmp.eq.s32.totalorder %s24, 0
      %p114 = por %p112, %p113
      %s116 = sadd.s32 %s115, 1
      %p119 = scmp.eq.s32.totalorder %s18, 1
      %p120 = scmp.ne.s32.totalorder %s115, %s117
      %p121 = scmp.eq.s32.totalorder %s18, 0
      %p122 = por %p120, %p121
      %p123 = scmp.ne.s32.totalorder %s115, %s117
      %p124 = scmp.eq.s32.totalorder %s23, 1
      %p125 = por %p123, %p124
      %p126 = scmp.ne.s32.totalorder %s117, %s118
      %p127 = scmp.eq.s32.totalorder %s23, 0
      %p128 = por %p126, %p127
      %p129 = scmp.ne.s32.totalorder %s117, %s118
      %p130 = scmp.eq.s32.totalorder %s24, 1
      %p131 = por %p129, %p130
      %p133 = scmp.ne.s32.totalorder %s118, %s132
      %p134 = scmp.eq.s32.totalorder %s24, 0
      %p135 = por %p133, %p134
      %s137 = sadd.s32 %s136, 1
      %p140 = scmp.eq.s32.totalorder %s18, 1
      %p141 = scmp.ne.s32.totalorder %s136, %s138
      %p142 = scmp.eq.s32.totalorder %s18, 0
      %p143 = por %p141, %p142
      %p144 = scmp.ne.s32.totalorder %s136, %s138
      %p145 = scmp.eq.s32.totalorder %s23, 1
      %p146 = por %p144, %p145
      %p147 = scmp.ne.s32.totalorder %s138, %s139
      %p148 = scmp.eq.s32.totalorder %s23, 0
      %p149 = por %p147, %p148
      %p150 = scmp.ne.s32.totalorder %s138, %s139
      %p151 = scmp.eq.s32.totalorder %s24, 1
      %p152 = por %p150, %p151
      %p154 = scmp.ne.s32.totalorder %s139, %s153
      %p155 = scmp.eq.s32.totalorder %s24, 0
      %p156 = por %p154, %p155
      %s158 = sadd.s32 %s157, 1
      %p161 = scmp.eq.s32.totalorder %s18, 1
      %p162 = scmp.ne.s32.totalorder %s157, %s159
      %p163 = scmp.eq.s32.totalorder %s18, 0
      %p164 = por %p162, %p163
      %p165 = scmp.ne.s32.totalorder %s157, %s159
      %p166 = scmp.eq.s32.totalorder %s23, 1
      %p167 = por %p165, %p166
      %p168 = scmp.ne.s32.totalorder %s159, %s160
      %p169 = scmp.eq.s32.totalorder %s23, 0
      %p170 = por %p168, %p169
      %p171 = scmp.ne.s32.totalorder %s159, %s160
      %p172 = scmp.eq.s32.totalorder %s24, 1
      %p173 = por %p171, %p172
      %p175 = scmp.ne.s32.totalorder %s160, %s174
      %p176 = scmp.eq.s32.totalorder %s24, 0
      %p177 = por %p175, %p176
      %s178 = ssub.s32 %s18, %s25
      %p179 = scmp.eq.s32.totalorder %s178, 0
      %s181 = sadd.s32 %s180, 1
      %s182 = scalar_select %p179, %s180, %s181
      %p185 = pneg %p179
      %p186 = scmp.eq.s32.totalorder %s18, 1
      %p187 = por %p185, %p186
      %p188 = scmp.ne.s32.totalorder %s180, %s183
      %p189 = scmp.eq.s32.totalorder %s18, 0
      %p190 = por %p188, %p189
      %p191 = scmp.ne.s32.totalorder %s180, %s183
      %p192 = scmp.eq.s32.totalorder %s23, 1
      %p193 = por %p191, %p192
      %p194 = scmp.ne.s32.totalorder %s183, %s184
      %p195 = scmp.eq.s32.totalorder %s23, 0
      %p196 = por %p194, %p195
      %p197 = scmp.ne.s32.totalorder %s183, %s184
      %p198 = scmp.eq.s32.totalorder %s24, 1
      %p199 = por %p197, %p198
      %p201 = scmp.ne.s32.totalorder %s184, %s200
      %p202 = scmp.eq.s32.totalorder %s24, 0
      %p203 = por %p201, %p202
      %p204 = scmp.le.s32.totalorder 1, %s18
      %p205 = scmp.lt.s32.totalorder %s18, 3
      %p206 = pnand %p204, %p205
      %p207 = pneg %p206
      // Predicated region
      $region9: #{tpu_custom_call.1} parent=5 // pred_check
        _
      $region10: #{tpu_custom_call.1} parent=5 // pred_check_branch
        %209 = sbr.rel (%p206) target = $region12
      $region11: #{tpu_custom_call.1} parent=5 // pred_region
        %s210 = ssub.s32 %s18, 1
        // Predicated region
        $region13: #{tpu_custom_call.1} parent=11 // pred_check
          %p211 = pneg %p65
        $region14: #{tpu_custom_call.1} parent=11 // pred_check_branch
          %213 = sbr.rel (%p211) target = $region16
        $region15: #{tpu_custom_call.1} parent=11 // pred_region
          _
        $region16: #{tpu_custom_call.1} parent=11 // pred_fallthru
          _
        // Predicated region
        $region17: #{tpu_custom_call.1} parent=11 // pred_check
          %p214 = pneg %p86
        $region18: #{tpu_custom_call.1} parent=11 // pred_check_branch
          %216 = sbr.rel (%p214) target = $region20
        $region19: #{tpu_custom_call.1} parent=11 // pred_region
          _
        $region20: #{tpu_custom_call.1} parent=11 // pred_fallthru
          _
        // Predicated region
        $region21: #{tpu_custom_call.1} parent=11 // pred_check
          %p217 = pneg %p107
        $region22: #{tpu_custom_call.1} parent=11 // pred_check_branch
          %219 = sbr.rel (%p217) target = $region24
        $region23: #{tpu_custom_call.1} parent=11 // pred_region
          _
        $region24: #{tpu_custom_call.1} parent=11 // pred_fallthru
          _
        // Predicated region
        $region25: #{tpu_custom_call.1} parent=11 // pred_check
          %p220 = pneg %p128
        $region26: #{tpu_custom_call.1} parent=11 // pred_check_branch
          %222 = sbr.rel (%p220) target = $region28
        $region27: #{tpu_custom_call.1} parent=11 // pred_region
          _
        $region28: #{tpu_custom_call.1} parent=11 // pred_fallthru
          _
        // Predicated region
        $region29: #{tpu_custom_call.1} parent=11 // pred_check
          %p223 = pneg %p149
        $region30: #{tpu_custom_call.1} parent=11 // pred_check_branch
          %225 = sbr.rel (%p223) target = $region32
        $region31: #{tpu_custom_call.1} parent=11 // pred_region
          _
        $region32: #{tpu_custom_call.1} parent=11 // pred_fallthru
          _
        // Predicated region
        $region33: #{tpu_custom_call.1} parent=11 // pred_check
          %p226 = pneg %p170
        $region34: #{tpu_custom_call.1} parent=11 // pred_check_branch
          %228 = sbr.rel (%p226) target = $region36
        $region35: #{tpu_custom_call.1} parent=11 // pred_region
          _
        $region36: #{tpu_custom_call.1} parent=11 // pred_fallthru
          _
      $region12: #{tpu_custom_call.1} parent=5 // pred_fallthru
        _
      %p229 = scmp.lt.s32.totalorder %s18, 2
      // Predicated region
      $region37: #{tpu_custom_call.1} parent=5 // pred_check
        %p230 = pneg %p229
      $region38: #{tpu_custom_call.1} parent=5 // pred_check_branch
        %232 = sbr.rel (%p230) target = $region40
      $region39: #{tpu_custom_call.1} parent=5 // pred_region
        // Predicated region
        $region41: #{tpu_custom_call.1} parent=39 // pred_check
          %p233 = pneg %p38
        $region42: #{tpu_custom_call.1} parent=39 // pred_check_branch
          %235 = sbr.rel (%p233) target = $region44
        $region43: #{tpu_custom_call.1} parent=39 // pred_region
          %s236 = smul.u32 32, %s18
          %p237 = scmp.lt.s32.totalorder %s236, 63
          %s238 = scalar_select %p237, %s236, 63
          %s239 = smul.addr %s238, 8
          %s240 = scalar_lea.vmem %s0, %s239
          %s241 = smul.u32 32, %s18
        $region44: #{tpu_custom_call.1} parent=39 // pred_fallthru
          _
      $region40: #{tpu_custom_call.1} parent=5 // pred_fallthru
        _
      %p242 = scmp.le.s32.totalorder 1, %s18
      %p243 = scmp.lt.s32.totalorder %s18, 3
      %p244 = pnand %p242, %p243
      %p245 = pneg %p244
      // Predicated region
      $region45: #{tpu_custom_call.1} parent=5 // pred_check
        _
      $region46: #{tpu_custom_call.1} parent=5 // pred_check_branch
        %247 = sbr.rel (%p244) target = $region48
      $region47: #{tpu_custom_call.1} parent=5 // pred_region
        %s248 = ssub.s32 %s18, 1
        %s249 = smul.u32 32, %s23
        %p250 = scmp.lt.s32.totalorder %s249, 63
        %s251 = scalar_select %p250, %s249, 63
        %s252 = smul.addr %s251, 8
        %s253 = scalar_lea.vmem %s0, %s252
        %p254 = pneg %p44
        %p255 = pneg %p41
        %p256 = pneg %p65
        %p257 = pneg %p62
        %p258 = pneg %p86
        %p259 = pneg %p83
        %p260 = pneg %p107
        %p261 = pneg %p104
        %p262 = pneg %p128
        %p263 = pneg %p125
        %p264 = pneg %p149
        %p265 = pneg %p146
        %p266 = pneg %p170
        %p267 = pneg %p167
        %p268 = pneg %p196
        %p269 = pneg %p193
        %s270 = sand.u32 %s183, 1
        %s271 = scalar_lea.sflag [#allocation4], %s270
        %s272 = sand.u32 %s183, 1
        %s273 = smul.addr %s272, 2
        %s274 = scalar_lea.vmem [#allocation3], %s273
        %s275 = smul.u32 32, %s23
        %p276 = scmp.lt.s32.totalorder %s275, 63
        %s277 = scalar_select %p276, %s275, 63
        %s278 = smul.addr %s277, 8
        %s279 = scalar_lea.vmem %s0, %s278
        %s280 = smul.u32 32, %s23
        %v281 = vld [vmem:[%s279] sm:$0xff]
        %v282 = vld [vmem:[%s279 + $0x8] sm:$0xff]
        %v283 = vld [vmem:[%s279 + $0x10] sm:$0xff]
        %v284 = vld [vmem:[%s279 + $0x18] sm:$0xff]
        %v285 = vld [vmem:[%s279 + $0x20] sm:$0xff]
        %v286 = vld [vmem:[%s279 + $0x28] sm:$0xff]
        %v287 = vld [vmem:[%s279 + $0x30] sm:$0xff]
        %v288 = vld [vmem:[%s279 + $0x38] sm:$0xff]
        %v289 = vld [vmem:[%s279 + $0x40] sm:$0xff]
        %v290 = vld [vmem:[%s279 + $0x48] sm:$0xff]
        %v291 = vld [vmem:[%s279 + $0x50] sm:$0xff]
        %v292 = vld [vmem:[%s279 + $0x58] sm:$0xff]
        %v293 = vld [vmem:[%s279 + $0x60] sm:$0xff]
        %v294 = vld [vmem:[%s279 + $0x68] sm:$0xff]
        %v295 = vld [vmem:[%s279 + $0x70] sm:$0xff]
        %v296 = vld [vmem:[%s279 + $0x78] sm:$0xff]
        %v297 = vld [vmem:[%s279 + $0x80] sm:$0xff]
        %v298 = vld [vmem:[%s279 + $0x88] sm:$0xff]
        %v299 = vld [vmem:[%s279 + $0x90] sm:$0xff]
        %v300 = vld [vmem:[%s279 + $0x98] sm:$0xff]
        %v301 = vld [vmem:[%s279 + $0xa0] sm:$0xff]
        %v302 = vld [vmem:[%s279 + $0xa8] sm:$0xff]
        %v303 = vld [vmem:[%s279 + $0xb0] sm:$0xff]
        %v304 = vld [vmem:[%s279 + $0xb8] sm:$0xff]
        %v305 = vld [vmem:[%s279 + $0xc0] sm:$0xff]
        %v306 = vld [vmem:[%s279 + $0xc8] sm:$0xff]
        %v307 = vld [vmem:[%s279 + $0xd0] sm:$0xff]
        %v308 = vld [vmem:[%s279 + $0xd8] sm:$0xff]
        %v309 = vld [vmem:[%s279 + $0xe0] sm:$0xff]
        %v310 = vld [vmem:[%s279 + $0xe8] sm:$0xff]
        %v311 = vld [vmem:[%s279 + $0xf0] sm:$0xff]
        %v312 = vld [vmem:[%s279 + $0xf8] sm:$0xff]
        %v313 = vld [vmem:[%s1] sm:$0xff]
        %v314 = vld [vmem:[%s1 + $0x8] sm:$0xff]
        %v315 = vld [vmem:[%s2] sm:$0x1]
        %v317 = vperm.slane %v315, 0
        %vm319 = vcmask 130048
        %v321 = vsel %vm319, %v281, 0
        %v324 = vsel %vm319, %v282, 0
        %v327 = vsel %vm319, %v283, 0
        %v330 = vsel %vm319, %v284, 0
        %v333 = vsel %vm319, %v285, 0
        %v336 = vsel %vm319, %v286, 0
        %v339 = vsel %vm319, %v287, 0
        %v342 = vsel %vm319, %v288, 0
        %v345 = vsel %vm319, %v289, 0
        %v348 = vsel %vm319, %v290, 0
        %v351 = vsel %vm319, %v291, 0
        %v354 = vsel %vm319, %v292, 0
        %v357 = vsel %vm319, %v293, 0
        %v360 = vsel %vm319, %v294, 0
        %v363 = vsel %vm319, %v295, 0
        %v366 = vsel %vm319, %v296, 0
        %v369 = vsel %vm319, %v297, 0
        %v372 = vsel %vm319, %v298, 0
        %v375 = vsel %vm319, %v299, 0
        %v378 = vsel %vm319, %v300, 0
        %v381 = vsel %vm319, %v301, 0
        %v384 = vsel %vm319, %v302, 0
        %v387 = vsel %vm319, %v303, 0
        %v390 = vsel %vm319, %v304, 0
        %v393 = vsel %vm319, %v305, 0
        %v396 = vsel %vm319, %v306, 0
        %v399 = vsel %vm319, %v307, 0
        %v402 = vsel %vm319, %v308, 0
        %v405 = vsel %vm319, %v309, 0
        %v408 = vsel %vm319, %v310, 0
        %v411 = vsel %vm319, %v311, 0
        %v414 = vsel %vm319, %v312, 0
        %416 = vmatpush.msra.mxu0 0.0
        %417 = vmatpush.msra.mxu0 0.0
        %418 = vmatpush.msra.mxu0 0.0
        %419 = vmatpush.msra.mxu0 0.0
        %420 = vmatpush.msra.mxu0 0.0
        %421 = vmatpush.msra.mxu0 0.0
        %422 = vmatpush.msra.mxu0 0.0
        %423 = vmatpush.msra.mxu0 0.0
        %424 = vmatpush.msra.mxu0 0.0
        %425 = vmatpush.msra.mxu0 0.0
        %426 = vmatpush.msra.mxu0 0.0
        %427 = vmatpush.msra.mxu0 0.0
        %428 = vmatpush.msra.mxu0 0.0
        %429 = vmatpush.msra.mxu0 0.0
        %430 = vmatpush.msra.mxu0 %v314
        %431 = vmatpush.msra.mxu0 %v313
        %432 = vmatmul.f32.gmra.mxu0 %v321
        %v433 = vpop.f32.mrf.mxu0
        %v434 = vadd.f32 %v317, %v433
        %435 = vmatmul.f32.gmra.mxu0 %v324
        %v436 = vpop.f32.mrf.mxu0
        %v437 = vadd.f32 %v317, %v436
        %438 = vmatmul.f32.gmra.mxu0 %v327
        %v439 = vpop.f32.mrf.mxu0
        %v440 = vadd.f32 %v317, %v439
        %441 = vmatmul.f32.gmra.mxu0 %v330
        %v442 = vpop.f32.mrf.mxu0
        %v443 = vadd.f32 %v317, %v442
        %444 = vmatmul.f32.gmra.mxu0 %v333
        %v445 = vpop.f32.mrf.mxu0
        %v446 = vadd.f32 %v317, %v445
        %447 = vmatmul.f32.gmra.mxu0 %v336
        %v448 = vpop.f32.mrf.mxu0
        %v449 = vadd.f32 %v317, %v448
        %450 = vmatmul.f32.gmra.mxu0 %v339
        %v451 = vpop.f32.mrf.mxu0
        %v452 = vadd.f32 %v317, %v451
        %453 = vmatmul.f32.gmra.mxu0 %v342
        %v454 = vpop.f32.mrf.mxu0
        %v455 = vadd.f32 %v317, %v454
        %456 = vmatmul.f32.gmra.mxu0 %v345
        %v457 = vpop.f32.mrf.mxu0
        %v458 = vadd.f32 %v317, %v457
        %459 = vmatmul.f32.gmra.mxu0 %v348
        %v460 = vpop.f32.mrf.mxu0
        %v461 = vadd.f32 %v317, %v460
        %462 = vmatmul.f32.gmra.mxu0 %v351
        %v463 = vpop.f32.mrf.mxu0
        %v464 = vadd.f32 %v317, %v463
        %465 = vmatmul.f32.gmra.mxu0 %v354
        %v466 = vpop.f32.mrf.mxu0
        %v467 = vadd.f32 %v317, %v466
        %468 = vmatmul.f32.gmra.mxu0 %v357
        %v469 = vpop.f32.mrf.mxu0
        %v470 = vadd.f32 %v317, %v469
        %471 = vmatmul.f32.gmra.mxu0 %v360
        %v472 = vpop.f32.mrf.mxu0
        %v473 = vadd.f32 %v317, %v472
        %474 = vmatmul.f32.gmra.mxu0 %v363
        %v475 = vpop.f32.mrf.mxu0
        %v476 = vadd.f32 %v317, %v475
        %477 = vmatmul.f32.gmra.mxu0 %v366
        %v478 = vpop.f32.mrf.mxu0
        %v479 = vadd.f32 %v317, %v478
        %480 = vmatmul.f32.gmra.mxu0 %v369
        %v481 = vpop.f32.mrf.mxu0
        %v482 = vadd.f32 %v317, %v481
        %483 = vmatmul.f32.gmra.mxu0 %v372
        %v484 = vpop.f32.mrf.mxu0
        %v485 = vadd.f32 %v317, %v484
        %486 = vmatmul.f32.gmra.mxu0 %v375
        %v487 = vpop.f32.mrf.mxu0
        %v488 = vadd.f32 %v317, %v487
        %489 = vmatmul.f32.gmra.mxu0 %v378
        %v490 = vpop.f32.mrf.mxu0
        %v491 = vadd.f32 %v317, %v490
        %492 = vmatmul.f32.gmra.mxu0 %v381
        %v493 = vpop.f32.mrf.mxu0
        %v494 = vadd.f32 %v317, %v493
        %495 = vmatmul.f32.gmra.mxu0 %v384
        %v496 = vpop.f32.mrf.mxu0
        %v497 = vadd.f32 %v317, %v496
        %498 = vmatmul.f32.gmra.mxu0 %v387
        %v499 = vpop.f32.mrf.mxu0
        %v500 = vadd.f32 %v317, %v499
        %501 = vmatmul.f32.gmra.mxu0 %v390
        %v502 = vpop.f32.mrf.mxu0
        %v503 = vadd.f32 %v317, %v502
        %504 = vmatmul.f32.gmra.mxu0 %v393
        %v505 = vpop.f32.mrf.mxu0
        %v506 = vadd.f32 %v317, %v505
        %507 = vmatmul.f32.gmra.mxu0 %v396
        %v508 = vpop.f32.mrf.mxu0
        %v509 = vadd.f32 %v317, %v508
        %510 = vmatmul.f32.gmra.mxu0 %v399
        %v511 = vpop.f32.mrf.mxu0
        %v512 = vadd.f32 %v317, %v511
        %513 = vmatmul.f32.gmra.mxu0 %v402
        %v514 = vpop.f32.mrf.mxu0
        %v515 = vadd.f32 %v317, %v514
        %516 = vmatmul.f32.gmra.mxu0 %v405
        %v517 = vpop.f32.mrf.mxu0
        %v518 = vadd.f32 %v317, %v517
        %519 = vmatmul.f32.gmra.mxu0 %v408
        %v520 = vpop.f32.mrf.mxu0
        %v521 = vadd.f32 %v317, %v520
        %522 = vmatmul.f32.gmra.mxu0 %v411
        %v523 = vpop.f32.mrf.mxu0
        %v524 = vadd.f32 %v317, %v523
        %525 = vmatmul.f32.gmra.mxu0 %v414
        %v526 = vpop.f32.mrf.mxu0
        %v527 = vadd.f32 %v317, %v526
        %528 = vdwg.mxu0
        %v529 = vmax.f32 %v434, 0.0
        %v530 = vmax.f32 %v437, 0.0
        %v531 = vmax.f32 %v440, 0.0
        %v532 = vmax.f32 %v443, 0.0
        %v533 = vmax.f32 %v446, 0.0
        %v534 = vmax.f32 %v449, 0.0
        %v535 = vmax.f32 %v452, 0.0
        %v536 = vmax.f32 %v455, 0.0
        %v537 = vmax.f32 %v458, 0.0
        %v538 = vmax.f32 %v461, 0.0
        %v539 = vmax.f32 %v464, 0.0
        %v540 = vmax.f32 %v467, 0.0
        %v541 = vmax.f32 %v470, 0.0
        %v542 = vmax.f32 %v473, 0.0
        %v543 = vmax.f32 %v476, 0.0
        %v544 = vmax.f32 %v479, 0.0
        %v545 = vmax.f32 %v482, 0.0
        %v546 = vmax.f32 %v485, 0.0
        %v547 = vmax.f32 %v488, 0.0
        %v548 = vmax.f32 %v491, 0.0
        %v549 = vmax.f32 %v494, 0.0
        %v550 = vmax.f32 %v497, 0.0
        %v551 = vmax.f32 %v500, 0.0
        %v552 = vmax.f32 %v503, 0.0
        %v553 = vmax.f32 %v506, 0.0
        %v554 = vmax.f32 %v509, 0.0
        %v555 = vmax.f32 %v512, 0.0
        %v556 = vmax.f32 %v515, 0.0
        %v557 = vmax.f32 %v518, 0.0
        %v558 = vmax.f32 %v521, 0.0
        %v559 = vmax.f32 %v524, 0.0
        %v560 = vmax.f32 %v527, 0.0
        %v561 = vld [vmem:[%s3] sm:$0xff]
        %v562 = vld [vmem:[%s3 + $0x8] sm:$0xff]
        %v563 = vld [vmem:[%s3 + $0x10] sm:$0xff]
        %v564 = vld [vmem:[%s3 + $0x18] sm:$0xff]
        %v565 = vld [vmem:[%s3 + $0x20] sm:$0xff]
        %v566 = vld [vmem:[%s3 + $0x28] sm:$0xff]
        %v567 = vld [vmem:[%s3 + $0x30] sm:$0xff]
        %v568 = vld [vmem:[%s3 + $0x38] sm:$0xff]
        %v569 = vld [vmem:[%s3 + $0x40] sm:$0xff]
        %v570 = vld [vmem:[%s3 + $0x48] sm:$0xff]
        %v571 = vld [vmem:[%s3 + $0x50] sm:$0xff]
        %v572 = vld [vmem:[%s3 + $0x58] sm:$0xff]
        %v573 = vld [vmem:[%s3 + $0x60] sm:$0xff]
        %v574 = vld [vmem:[%s3 + $0x68] sm:$0xff]
        %v575 = vld [vmem:[%s3 + $0x70] sm:$0xff]
        %v576 = vld [vmem:[%s3 + $0x78] sm:$0xff]
        %v577 = vld [vmem:[%s4] sm:$0x1]
        %v579 = vperm.slane %v577, 0
        %581 = vmatpush.msra.mxu0 %v576
        %582 = vmatpush.msra.mxu0 %v575
        %583 = vmatpush.msra.mxu0 %v574
        %584 = vmatpush.msra.mxu0 %v573
        %585 = vmatpush.msra.mxu0 %v572
        %586 = vmatpush.msra.mxu0 %v571
        %587 = vmatpush.msra.mxu0 %v570
        %588 = vmatpush.msra.mxu0 %v569
        %589 = vmatpush.msra.mxu0 %v568
        %590 = vmatpush.msra.mxu0 %v567
        %591 = vmatpush.msra.mxu0 %v566
        %592 = vmatpush.msra.mxu0 %v565
        %593 = vmatpush.msra.mxu0 %v564
        %594 = vmatpush.msra.mxu0 %v563
        %595 = vmatpush.msra.mxu0 %v562
        %596 = vmatpush.msra.mxu0 %v561
        %597 = vmatmul.f32.gmra.mxu0 %v529
        %v598 = vpop.f32.mrf.mxu0
        %v599 = vadd.f32 %v579, %v598
        %600 = vmatmul.f32.gmra.mxu0 %v530
        %v601 = vpop.f32.mrf.mxu0
        %v602 = vadd.f32 %v579, %v601
        %603 = vmatmul.f32.gmra.mxu0 %v531
        %v604 = vpop.f32.mrf.mxu0
        %v605 = vadd.f32 %v579, %v604
        %606 = vmatmul.f32.gmra.mxu0 %v532
        %v607 = vpop.f32.mrf.mxu0
        %v608 = vadd.f32 %v579, %v607
        %609 = vmatmul.f32.gmra.mxu0 %v533
        %v610 = vpop.f32.mrf.mxu0
        %v611 = vadd.f32 %v579, %v610
        %612 = vmatmul.f32.gmra.mxu0 %v534
        %v613 = vpop.f32.mrf.mxu0
        %v614 = vadd.f32 %v579, %v613
        %615 = vmatmul.f32.gmra.mxu0 %v535
        %v616 = vpop.f32.mrf.mxu0
        %v617 = vadd.f32 %v579, %v616
        %618 = vmatmul.f32.gmra.mxu0 %v536
        %v619 = vpop.f32.mrf.mxu0
        %v620 = vadd.f32 %v579, %v619
        %621 = vmatmul.f32.gmra.mxu0 %v537
        %v622 = vpop.f32.mrf.mxu0
        %v623 = vadd.f32 %v579, %v622
        %624 = vmatmul.f32.gmra.mxu0 %v538
        %v625 = vpop.f32.mrf.mxu0
        %v626 = vadd.f32 %v579, %v625
        %627 = vmatmul.f32.gmra.mxu0 %v539
        %v628 = vpop.f32.mrf.mxu0
        %v629 = vadd.f32 %v579, %v628
        %630 = vmatmul.f32.gmra.mxu0 %v540
        %v631 = vpop.f32.mrf.mxu0
        %v632 = vadd.f32 %v579, %v631
        %633 = vmatmul.f32.gmra.mxu0 %v541
        %v634 = vpop.f32.mrf.mxu0
        %v635 = vadd.f32 %v579, %v634
        %636 = vmatmul.f32.gmra.mxu0 %v542
        %v637 = vpop.f32.mrf.mxu0
        %v638 = vadd.f32 %v579, %v637
        %639 = vmatmul.f32.gmra.mxu0 %v543
        %v640 = vpop.f32.mrf.mxu0
        %v641 = vadd.f32 %v579, %v640
        %642 = vmatmul.f32.gmra.mxu0 %v544
        %v643 = vpop.f32.mrf.mxu0
        %v644 = vadd.f32 %v579, %v643
        %645 = vmatmul.f32.gmra.mxu0 %v545
        %v646 = vpop.f32.mrf.mxu0
        %v647 = vadd.f32 %v579, %v646
        %648 = vmatmul.f32.gmra.mxu0 %v546
        %v649 = vpop.f32.mrf.mxu0
        %v650 = vadd.f32 %v579, %v649
        %651 = vmatmul.f32.gmra.mxu0 %v547
        %v652 = vpop.f32.mrf.mxu0
        %v653 = vadd.f32 %v579, %v652
        %654 = vmatmul.f32.gmra.mxu0 %v548
        %v655 = vpop.f32.mrf.mxu0
        %v656 = vadd.f32 %v579, %v655
        %657 = vmatmul.f32.gmra.mxu0 %v549
        %v658 = vpop.f32.mrf.mxu0
        %v659 = vadd.f32 %v579, %v658
        %660 = vmatmul.f32.gmra.mxu0 %v550
        %v661 = vpop.f32.mrf.mxu0
        %v662 = vadd.f32 %v579, %v661
        %663 = vmatmul.f32.gmra.mxu0 %v551
        %v664 = vpop.f32.mrf.mxu0
        %v665 = vadd.f32 %v579, %v664
        %666 = vmatmul.f32.gmra.mxu0 %v552
        %v667 = vpop.f32.mrf.mxu0
        %v668 = vadd.f32 %v579, %v667
        %669 = vmatmul.f32.gmra.mxu0 %v553
        %v670 = vpop.f32.mrf.mxu0
        %v671 = vadd.f32 %v579, %v670
        %672 = vmatmul.f32.gmra.mxu0 %v554
        %v673 = vpop.f32.mrf.mxu0
        %v674 = vadd.f32 %v579, %v673
        %675 = vmatmul.f32.gmra.mxu0 %v555
        %v676 = vpop.f32.mrf.mxu0
        %v677 = vadd.f32 %v579, %v676
        %678 = vmatmul.f32.gmra.mxu0 %v556
        %v679 = vpop.f32.mrf.mxu0
        %v680 = vadd.f32 %v579, %v679
        %681 = vmatmul.f32.gmra.mxu0 %v557
        %v682 = vpop.f32.mrf.mxu0
        %v683 = vadd.f32 %v579, %v682
        %684 = vmatmul.f32.gmra.mxu0 %v558
        %v685 = vpop.f32.mrf.mxu0
        %v686 = vadd.f32 %v579, %v685
        %687 = vmatmul.f32.gmra.mxu0 %v559
        %v688 = vpop.f32.mrf.mxu0
        %v689 = vadd.f32 %v579, %v688
        %690 = vmatmul.f32.gmra.mxu0 %v560
        %v691 = vpop.f32.mrf.mxu0
        %v692 = vadd.f32 %v579, %v691
        %693 = vdwg.mxu0
        %v694 = vmax.f32 %v599, 0.0
        %v695 = vmax.f32 %v602, 0.0
        %v696 = vmax.f32 %v605, 0.0
        %v697 = vmax.f32 %v608, 0.0
        %v698 = vmax.f32 %v611, 0.0
        %v699 = vmax.f32 %v614, 0.0
        %v700 = vmax.f32 %v617, 0.0
        %v701 = vmax.f32 %v620, 0.0
        %v702 = vmax.f32 %v623, 0.0
        %v703 = vmax.f32 %v626, 0.0
        %v704 = vmax.f32 %v629, 0.0
        %v705 = vmax.f32 %v632, 0.0
        %v706 = vmax.f32 %v635, 0.0
        %v707 = vmax.f32 %v638, 0.0
        %v708 = vmax.f32 %v641, 0.0
        %v709 = vmax.f32 %v644, 0.0
        %v710 = vmax.f32 %v647, 0.0
        %v711 = vmax.f32 %v650, 0.0
        %v712 = vmax.f32 %v653, 0.0
        %v713 = vmax.f32 %v656, 0.0
        %v714 = vmax.f32 %v659, 0.0
        %v715 = vmax.f32 %v662, 0.0
        %v716 = vmax.f32 %v665, 0.0
        %v717 = vmax.f32 %v668, 0.0
        %v718 = vmax.f32 %v671, 0.0
        %v719 = vmax.f32 %v674, 0.0
        %v720 = vmax.f32 %v677, 0.0
        %v721 = vmax.f32 %v680, 0.0
        %v722 = vmax.f32 %v683, 0.0
        %v723 = vmax.f32 %v686, 0.0
        %v724 = vmax.f32 %v689, 0.0
        %v725 = vmax.f32 %v692, 0.0
        %v726 = vld [vmem:[%s5] sm:$0x1]
        %v727 = vld [vmem:[#allocation2] sm:$0x1]
        %729 = vset.pattern.permute.xlu0 0
        %730 = vperm.xlu0 %729, %v727
        %v731 = vpop.permute.xlu0 %730
        %v733 = vperm.slane %v731, 0
        %734 = vmatpush.xpose.msra.mxu0 %v709
        %735 = vmatpush.xpose.msra.mxu0 %v708
        %736 = vmatpush.xpose.msra.mxu0 %v707
        %737 = vmatpush.xpose.msra.mxu0 %v706
        %738 = vmatpush.xpose.msra.mxu0 %v705
        %739 = vmatpush.xpose.msra.mxu0 %v704
        %740 = vmatpush.xpose.msra.mxu0 %v703
        %741 = vmatpush.xpose.msra.mxu0 %v702
        %742 = vmatpush.xpose.msra.mxu0 %v701
        %743 = vmatpush.xpose.msra.mxu0 %v700
        %744 = vmatpush.xpose.msra.mxu0 %v699
        %745 = vmatpush.xpose.msra.mxu0 %v698
        %746 = vmatpush.xpose.msra.mxu0 %v697
        %747 = vmatpush.xpose.msra.mxu0 %v696
        %748 = vmatpush.xpose.msra.mxu0 %v695
        %749 = vmatpush.xpose.msra.mxu0 %v694
        %750 = vmatmul.f32.gmra.mxu0 %v726
        %v751 = vpop.f32.mrf.mxu0
        %v752 = vadd.f32 %v733, %v751
        %753 = vdwg.mxu0
        %754 = vmatpush.xpose.msra.mxu0 %v725
        %755 = vmatpush.xpose.msra.mxu0 %v724
        %756 = vmatpush.xpose.msra.mxu0 %v723
        %757 = vmatpush.xpose.msra.mxu0 %v722
        %758 = vmatpush.xpose.msra.mxu0 %v721
        %759 = vmatpush.xpose.msra.mxu0 %v720
        %760 = vmatpush.xpose.msra.mxu0 %v719
        %761 = vmatpush.xpose.msra.mxu0 %v718
        %762 = vmatpush.xpose.msra.mxu0 %v717
        %763 = vmatpush.xpose.msra.mxu0 %v716
        %764 = vmatpush.xpose.msra.mxu0 %v715
        %765 = vmatpush.xpose.msra.mxu0 %v714
        %766 = vmatpush.xpose.msra.mxu0 %v713
        %767 = vmatpush.xpose.msra.mxu0 %v712
        %768 = vmatpush.xpose.msra.mxu0 %v711
        %769 = vmatpush.xpose.msra.mxu0 %v710
        %770 = vmatmul.f32.gmra.mxu0 %v726
        %v771 = vpop.f32.mrf.mxu0
        %v772 = vadd.f32 %v733, %v771
        %773 = vdwg.mxu0
        %v776 = vrot.slane %v772, 7
        %vm777 = vcmask 1040384
        %v778 = vsel %vm777, %v752, %v776
        %v780 = vlaneseq
        %vm781 = vcmp.ge.s32.totalorder %v780, 0
        %vm782 = vcmp.lt.s32.totalorder %v780, 256
        %vm783 = vmand %vm781, %vm782
        %784 = vst.msk [vmem:[%s274] sm:$0x3] %vm783, %v778
        %s785 = sand.u32 %s183, 1
        %s786 = scalar_lea.sflag [#allocation4], %s785
        %s787 = sand.u32 %s183, 1
        %s788 = smul.addr %s787, 2
        %s789 = scalar_lea.vmem [#allocation3], %s788
        // Predicated region
        $region49: #{tpu_custom_call.1} parent=47 // pred_check
          %p790 = pneg %p193
        $region50: #{tpu_custom_call.1} parent=47 // pred_check_branch
          %792 = sbr.rel (%p790) target = $region52
        $region51: #{tpu_custom_call.1} parent=47 // pred_region
          %794 = vsyncadd %s786, 0
          %s795 = smul.addr %s23, 2
          %s796 = scalar_lea.hbm %s7, %s795
          %s798 = sshll.u32 %s789, 4
          %s799 = int_to_ptr.vmem [resolvable:$true] %s798
          %s800 = sshll.u32 %s796, 4
          %s801 = int_to_ptr.hbm [resolvable:$true] %s800
          %803 = dma.vmem_to_hbm [thread:$0]  %s799, 32, %s801, %s786
        $region52: #{tpu_custom_call.1} parent=47 // pred_fallthru
          _
      $region48: #{tpu_custom_call.1} parent=5 // pred_fallthru
        _
      %p804 = scmp.le.s32.totalorder 2, %s18
      // Predicated region
      $region53: #{tpu_custom_call.1} parent=5 // pred_check
        %p805 = pneg %p804
      $region54: #{tpu_custom_call.1} parent=5 // pred_check_branch
        %807 = sbr.rel (%p805) target = $region56
      $region55: #{tpu_custom_call.1} parent=5 // pred_region
        %s808 = ssub.s32 %s18, 2
        // Predicated region
        $region57: #{tpu_custom_call.1} parent=55 // pred_check
          %p809 = pneg %p199
        $region58: #{tpu_custom_call.1} parent=55 // pred_check_branch
          %811 = sbr.rel (%p809) target = $region60
        $region59: #{tpu_custom_call.1} parent=55 // pred_region
          %s812 = sand.u32 %s184, 1
          %s813 = scalar_lea.sflag [#allocation4], %s812
          %s814 = sand.u32 %s184, 1
          %s815 = smul.addr %s814, 2
          %s816 = scalar_lea.vmem [#allocation3], %s815
          %818 = dma.done %s813, 32
        $region60: #{tpu_custom_call.1} parent=55 // pred_fallthru
          _
      $region56: #{tpu_custom_call.1} parent=5 // pred_fallthru
        _
    $region6: #{tpu_custom_call.1} parent=1 // loop_footer
      %s22 = sadd.s32 1, %s18
    $region7: #{tpu_custom_call.1} parent=1 // loop_footer_branch
      %17 = sbr.rel target = $region3
    $region8: #{tpu_custom_call.1} parent=1 // loop_exit
      _
    %819 = vsyncpa [#allocation4], 1
    %s820 = scalar_lea.sflag [#allocation4], 1
    %821 = vsyncpa %s820, 1

</llo_original>
